<compile_context>
chip_gen: v5e
topology: v5e:2x2
jax: 0.10.0
libtpu: 0.0.40
codegen_flags: <defaults>
</compile_context>

<pallas_src>
import functools

import jax
import jax.numpy as jnp
from jax import lax
from jax.experimental import pallas as pl
from jax.experimental.pallas import tpu as pltpu


def _round_up(x, m):
    return ((x + m - 1) // m) * m


def _pick_seq_chunk(seq, max_chunk=128):
    """Largest divisor of seq that is <= max_chunk."""
    for c in range(min(seq, max_chunk), 0, -1):
        if seq % c == 0:
            return c
    return seq


def _rnn_fc_kernel(n_layers, seq_chunk, bpad, hpad, ipad, opad, unroll, *refs):
    """refs = (x, [wihT, whhT, b] * n_layers, fc_wT, fc_b, out, hid, h_carry, act_buf)."""
    x_ref = refs[0]                                # (seq_chunk, bpad, ipad)  gemm dtype
    layer_refs = refs[1:1 + 3 * n_layers]
    fcw_ref = refs[1 + 3 * n_layers]               # (hpad, opad)             gemm dtype
    fcb_ref = refs[2 + 3 * n_layers]               # (1, opad)                f32
    out_ref = refs[3 + 3 * n_layers]               # (seq_chunk, bpad, opad)  f32
    hid_ref = refs[4 + 3 * n_layers]               # (n_layers, bpad, hpad)   f32
    h_carry = refs[5 + 3 * n_layers]               # VMEM (n_layers, bpad, hpad) f32, persists
    act_buf = refs[6 + 3 * n_layers]               # VMEM (seq_chunk, bpad, hpad) gemm dtype

    c = pl.program_id(0)

    @pl.when(c == 0)
    def _init():
        h_carry[...] = jnp.zeros_like(h_carry)

    for l in range(n_layers):
        wih = layer_refs[3 * l][...]               # (in_pad_l, hpad) gemm dtype
        whh = layer_refs[3 * l + 1][...]           # (hpad, hpad)     f32
        b = layer_refs[3 * l + 2][...]             # (1, hpad)        f32

        # --- hoisted input projection: one MXU matmul for all timesteps in the chunk ---
        if l == 0:
            x_flat = x_ref[...].reshape(seq_chunk * bpad, ipad)
        else:
            # leading-dim-only reshape of the in-place activation buffer: layout-neutral
            x_flat = act_buf[...].reshape(seq_chunk * bpad, hpad)
        pre = jnp.dot(x_flat, wih, preferred_element_type=jnp.float32) + b
        act_buf[...] = pre.reshape(seq_chunk, bpad, hpad).astype(act_buf.dtype)

        # --- recurrence: pre-activation is overwritten in place by the layer output ---
        def step(t, h, whh=whh):
            h = jnp.tanh(act_buf[t].astype(jnp.float32)
                         + jnp.dot(h, whh, preferred_element_type=jnp.float32))
            act_buf[t] = h.astype(act_buf.dtype)
            return h

        h_carry[l] = lax.fori_loop(0, seq_chunk, step, h_carry[l], unroll=unroll)

    # Final Linear over all (seq_chunk*bpad) rows of the last layer's outputs (lane-dense).
    feat = act_buf[...].reshape(seq_chunk * bpad, hpad)
    out = jnp.dot(feat, fcw_ref[...], preferred_element_type=jnp.float32) + fcb_ref[...]
    out_ref[...] = out.reshape(seq_chunk, bpad, opad)

    @pl.when(c == pl.num_programs(0) - 1)
    def _finish():
        hid_ref[...] = h_carry[...]


def rnn_model_forward(x, params, *, n_layers, hidden_dim,
                      gemm_dtype=jnp.float32, seq_chunk=None):
    """x: (batch, seq, input_size) f32.  Returns (out, hidden) like the torch module."""
    batch, seq, input_size = x.shape
    fc_w, fc_b = params["fc"]                      # (out, hid), (out,)
    output_size = fc_w.shape[0]

    bpad = _round_up(batch, 8)
    hpad = _round_up(hidden_dim, 128)
    ipad = _round_up(input_size, 128)
    opad = _round_up(output_size, 128)

    if seq_chunk is None:
        seq_chunk = _pick_seq_chunk(seq)
    assert seq % seq_chunk == 0, "seq_chunk must divide seq"
    num_chunks = seq // seq_chunk
    unroll = max(1, min(seq_chunk, 8))

    # (batch, seq, in) -> time-major, padded: (seq, bpad, ipad) in the GEMM dtype.
    x_sb = jnp.transpose(x, (1, 0, 2)).astype(jnp.float32)
    x_sb = jnp.pad(x_sb, ((0, 0), (0, bpad - batch), (0, ipad - input_size)))
    x_sb = x_sb.astype(gemm_dtype)

    flat_inputs = [x_sb]
    in_specs = [pl.BlockSpec((seq_chunk, bpad, ipad), lambda c: (c, 0, 0))]
    for l in range(n_layers):
        w_ih, w_hh, b_ih, b_hh = params[f"rnn_l{l}"]
        in_l = w_ih.shape[1]
        in_pad_l = ipad if l == 0 else hpad
        wihT = jnp.pad(jnp.transpose(w_ih),
                       ((0, in_pad_l - in_l), (0, hpad - hidden_dim))).astype(gemm_dtype)
        whhT = jnp.pad(jnp.transpose(w_hh),
                       ((0, hpad - hidden_dim), (0, hpad - hidden_dim)))  # stays f32
        bcomb = jnp.pad((b_ih + b_hh).reshape(1, hidden_dim),
                        ((0, 0), (0, hpad - hidden_dim)))                 # stays f32
        flat_inputs += [wihT, whhT, bcomb]
        in_specs += [pl.BlockSpec((in_pad_l, hpad), lambda c: (0, 0)),
                     pl.BlockSpec((hpad, hpad), lambda c: (0, 0)),
                     pl.BlockSpec((1, hpad), lambda c: (0, 0))]
    fcwT = jnp.pad(jnp.transpose(fc_w),
                   ((0, hpad - hidden_dim), (0, opad - output_size))).astype(gemm_dtype)
    fcb = jnp.pad(fc_b.reshape(1, output_size), ((0, 0), (0, opad - output_size)))
    flat_inputs += [fcwT, fcb]
    in_specs += [pl.BlockSpec((hpad, opad), lambda c: (0, 0)),
                 pl.BlockSpec((1, opad), lambda c: (0, 0))]

    out_specs = (
        pl.BlockSpec((seq_chunk, bpad, opad), lambda c: (c, 0, 0)),
        pl.BlockSpec((n_layers, bpad, hpad), lambda c: (0, 0, 0)),
    )
    out_shapes = (
        jax.ShapeDtypeStruct((seq, bpad, opad), jnp.float32),
        jax.ShapeDtypeStruct((n_layers, bpad, hpad), jnp.float32),
    )

    # Explicit VMEM budget: double-buffered in/out blocks + weights + scratch + headroom.
    gemm_bytes = 2 if gemm_dtype == jnp.bfloat16 else 4
    blk_bytes = seq_chunk * bpad * ipad * gemm_bytes                     # x block
    blk_bytes += seq_chunk * bpad * opad * 4 + n_layers * bpad * hpad * 4  # out blocks
    for l in range(n_layers):
        in_pad_l = ipad if l == 0 else hpad
        blk_bytes += in_pad_l * hpad * gemm_bytes + hpad * hpad * 4 + hpad * 4
    blk_bytes += hpad * opad * gemm_bytes + opad * 4
    scratch_bytes = n_layers * bpad * hpad * 4 + seq_chunk * bpad * hpad * gemm_bytes
    vmem_limit = min(max(2 * blk_bytes + scratch_bytes + (4 << 20), 16 << 20), 48 << 20)

    kernel = functools.partial(
        _rnn_fc_kernel, n_layers, seq_chunk, bpad, hpad, ipad, opad, unroll)

    out_pad, hid_pad = pl.pallas_call(
        kernel,
        grid=(num_chunks,),
        out_shape=out_shapes,
        in_specs=in_specs,
        out_specs=out_specs,
        scratch_shapes=[
            pltpu.VMEM((n_layers, bpad, hpad), jnp.float32),   # h carry across chunks
            pltpu.VMEM((seq_chunk, bpad, hpad), gemm_dtype),   # merged pre/act buffer
        ],
        compiler_params=pltpu.CompilerParams(
            dimension_semantics=("arbitrary",),
            vmem_limit_bytes=int(vmem_limit)),
    )(*flat_inputs)

    # Un-pad and restore torch ordering: out rows are b*seq + t.
    out = out_pad[:, :batch, :output_size]                     # (seq, batch, out)
    out = jnp.transpose(out, (1, 0, 2)).reshape(batch * seq, output_size)
    hidden = hid_pad[:, :batch, :hidden_dim]                   # (n_layers, batch, hid)
    return out, hidden


def init_params(key, input_size, output_size, hidden_dim, n_layers):
    """Deterministic init mirroring PyTorch's U(-1/sqrt(hidden_dim), 1/sqrt(hidden_dim))."""
    params = {}
    bound = 1.0 / jnp.sqrt(jnp.float32(hidden_dim))
    for l in range(n_layers):
        in_l = input_size if l == 0 else hidden_dim
        key, k1, k2, k3, k4 = jax.random.split(key, 5)
        params[f"rnn_l{l}"] = (
            jax.random.uniform(k1, (hidden_dim, in_l), jnp.float32, -bound, bound),
            jax.random.uniform(k2, (hidden_dim, hidden_dim), jnp.float32, -bound, bound),
            jax.random.uniform(k3, (hidden_dim,), jnp.float32, -bound, bound),
            jax.random.uniform(k4, (hidden_dim,), jnp.float32, -bound, bound),
        )
    key, k1, k2 = jax.random.split(key, 3)
    params["fc"] = (
        jax.random.uniform(k1, (output_size, hidden_dim), jnp.float32, -bound, bound),
        jax.random.uniform(k2, (output_size,), jnp.float32, -bound, bound),
    )
    return params


def _reference_forward(x, params, *, n_layers, hidden_dim):
    """Pure-JAX reference (same math as torch.nn.RNN(tanh) + Linear)."""
    batch, seq, _ = x.shape
    layer_in = x
    hiddens = []
    for l in range(n_layers):
        w_ih, w_hh, b_ih, b_hh = params[f"rnn_l{l}"]
        h = jnp.zeros((batch, hidden_dim), jnp.float32)
        outs = []
        for t in range(seq):
            h = jnp.tanh(layer_in[:, t, :] @ w_ih.T + b_ih + h @ w_hh.T + b_hh)
            outs.append(h)
        layer_in = jnp.stack(outs, axis=1)
        hiddens.append(h)
    fc_w, fc_b = params["fc"]
    out = layer_in.reshape(batch * seq, hidden_dim) @ fc_w.T + fc_b
    return out, jnp.stack(hiddens, axis=0)


if __name__ == "__main__":
    input_size, output_size, hidden_dim, n_layers = 16, 10, 32, 2
    batch, seq = 2, 8

    key = jax.random.PRNGKey(0)
    key, xk = jax.random.split(key)
    x = jax.random.normal(xk, (batch, seq, input_size), jnp.float32)
    params = init_params(key, input_size, output_size, hidden_dim, n_layers)

    ref_out, ref_hidden = _reference_forward(x, params, n_layers=n_layers, hidden_dim=hidden_dim)

    # f32-GEMM path (bit-accurate vs. reference; safe default on all chips, incl. v5e).
    out, hidden = rnn_model_forward(
        x, params, n_layers=n_layers, hidden_dim=hidden_dim, gemm_dtype=jnp.float32)
    jax.block_until_ready((out, hidden))
    assert out.shape == (batch * seq, output_size)
    assert hidden.shape == (n_layers, batch, hidden_dim)
    assert jnp.allclose(out, ref_out, atol=2e-5, rtol=2e-5)
    assert jnp.allclose(hidden, ref_hidden, atol=2e-5, rtol=2e-5)

    # bf16-GEMM / bf16-activation-storage path (v6e/v7x MXU throughput + half scratch);
    # h, the per-step add, tanh, and the recurrent matmul stay f32, so only GEMM/storage
    # rounding differs -> loose tolerance.
    out16, hidden16 = rnn_model_forward(
        x, params, n_layers=n_layers, hidden_dim=hidden_dim, gemm_dtype=jnp.bfloat16)
    jax.block_until_ready((out16, hidden16))
    assert jnp.allclose(out16, ref_out, atol=5e-2, rtol=5e-2)
    assert jnp.allclose(hidden16, ref_hidden, atol=5e-2, rtol=5e-2)

    print("KERNEL_OK")
</pallas_src>

<mosaic_0001>
module attributes {stable_mosaic.version = 11 : i64} {
  func.func @_rnn_fc_kernel(%arg0: i32, %arg1: memref<8x8x128xf32, #tpu.memory_space<vmem>>, %arg2: memref<128x128xf32, #tpu.memory_space<vmem>>, %arg3: memref<128x128xf32, #tpu.memory_space<vmem>>, %arg4: memref<1x128xf32, #tpu.memory_space<vmem>>, %arg5: memref<128x128xf32, #tpu.memory_space<vmem>>, %arg6: memref<128x128xf32, #tpu.memory_space<vmem>>, %arg7: memref<1x128xf32, #tpu.memory_space<vmem>>, %arg8: memref<128x128xf32, #tpu.memory_space<vmem>>, %arg9: memref<1x128xf32, #tpu.memory_space<vmem>>, %arg10: memref<8x8x128xf32, #tpu.memory_space<vmem>>, %arg11: memref<2x8x128xf32, #tpu.memory_space<vmem>>, %arg12: memref<2x8x128xf32, #tpu.memory_space<vmem>>, %arg13: memref<8x8x128xf32, #tpu.memory_space<vmem>>) attributes {dimension_semantics = [#tpu.dimension_semantics<arbitrary>], iteration_bounds = array<i64: 1>, scalar_prefetch = 0 : i64, scratch_operands = 2 : i64, tpu.core_type = #tpu.core_type<tc>, window_params = [{transform_indices = @transform_0, window_bounds = array<i64: 8, 8, 128>}, {pipeline_mode = #tpu.pipeline_mode<synchronous>, transform_indices = @transform_1, window_bounds = array<i64: 128, 128>}, {pipeline_mode = #tpu.pipeline_mode<synchronous>, transform_indices = @transform_2, window_bounds = array<i64: 128, 128>}, {pipeline_mode = #tpu.pipeline_mode<synchronous>, transform_indices = @transform_3, window_bounds = array<i64: 1, 128>}, {pipeline_mode = #tpu.pipeline_mode<synchronous>, transform_indices = @transform_4, window_bounds = array<i64: 128, 128>}, {pipeline_mode = #tpu.pipeline_mode<synchronous>, transform_indices = @transform_5, window_bounds = array<i64: 128, 128>}, {pipeline_mode = #tpu.pipeline_mode<synchronous>, transform_indices = @transform_6, window_bounds = array<i64: 1, 128>}, {pipeline_mode = #tpu.pipeline_mode<synchronous>, transform_indices = @transform_7, window_bounds = array<i64: 128, 128>}, {pipeline_mode = #tpu.pipeline_mode<synchronous>, transform_indices = @transform_8, window_bounds = array<i64: 1, 128>}, {transform_indices = @transform_9, window_bounds = array<i64: 8, 8, 128>}, {pipeline_mode = #tpu.pipeline_mode<synchronous>, transform_indices = @transform_10, window_bounds = array<i64: 2, 8, 128>}]} {
    %c0_i32 = arith.constant 0 : i32
    %0 = arith.cmpi eq, %arg0, %c0_i32 : i32
    %1 = arith.extui %0 : i1 to i32
    %c0_i32_0 = arith.constant 0 : i32
    %2 = arith.cmpi ne, %1, %c0_i32_0 : i32
    scf.if %2 {
      %cst_139 = arith.constant 0.000000e+00 : f32
      %205 = vector.broadcast %cst_139 : f32 to vector<2x8x128xf32>
      %c0_140 = arith.constant 0 : index
      %c0_141 = arith.constant 0 : index
      %c0_142 = arith.constant 0 : index
      %206 = vector.load %arg12[%c0_140, %c0_141, %c0_142] : memref<2x8x128xf32, #tpu.memory_space<vmem>>, vector<2x8x128xf32>
      tpu.vector_store %arg12[%c0_140, %c0_141, %c0_142], %205 {strides = array<i32>} : memref<2x8x128xf32, #tpu.memory_space<vmem>>, vector<2x8x128xf32>,
    } else {
    }
    %c0 = arith.constant 0 : index
    %c0_1 = arith.constant 0 : index
    %3 = vector.load %arg2[%c0, %c0_1] : memref<128x128xf32, #tpu.memory_space<vmem>>, vector<128x128xf32>
    %c0_2 = arith.constant 0 : index
    %c0_3 = arith.constant 0 : index
    %4 = vector.load %arg3[%c0_2, %c0_3] : memref<128x128xf32, #tpu.memory_space<vmem>>, vector<128x128xf32>
    %c0_4 = arith.constant 0 : index
    %c0_5 = arith.constant 0 : index
    %5 = vector.load %arg4[%c0_4, %c0_5] : memref<1x128xf32, #tpu.memory_space<vmem>>, vector<1x128xf32>
    %c0_6 = arith.constant 0 : index
    %c0_7 = arith.constant 0 : index
    %c0_8 = arith.constant 0 : index
    %6 = vector.load %arg1[%c0_6, %c0_7, %c0_8] : memref<8x8x128xf32, #tpu.memory_space<vmem>>, vector<8x8x128xf32>
    %7 = vector.shape_cast %6 : vector<8x8x128xf32> to vector<64x128xf32>
    %cst = arith.constant dense<0.000000e+00> : vector<64x128xf32>
    %8 = tpu.matmul %7, %3, %cst {dimension_numbers = #tpu.dot_dimension_numbers<[1], [0], [0], [1], [0, 0, 1, 1], [], []>} : vector<64x128xf32>, vector<128x128xf32>, vector<64x128xf32> -> vector<64x128xf32>
    %9 = vector.broadcast %5 : vector<1x128xf32> to vector<64x128xf32>
    %10 = arith.addf %8, %9 : vector<64x128xf32>
    %11 = vector.shape_cast %10 : vector<64x128xf32> to vector<8x8x128xf32>
    %c0_9 = arith.constant 0 : index
    %c0_10 = arith.constant 0 : index
    %c0_11 = arith.constant 0 : index
    %12 = vector.load %arg13[%c0_9, %c0_10, %c0_11] : memref<8x8x128xf32, #tpu.memory_space<vmem>>, vector<8x8x128xf32>
    tpu.vector_store %arg13[%c0_9, %c0_10, %c0_11], %11 {strides = array<i32>} : memref<8x8x128xf32, #tpu.memory_space<vmem>>, vector<8x8x128xf32>,
    %c0_12 = arith.constant 0 : index
    %c0_13 = arith.constant 0 : index
    %c0_14 = arith.constant 0 : index
    %13 = vector.load %arg12[%c0_12, %c0_13, %c0_14] : memref<2x8x128xf32, #tpu.memory_space<vmem>>, vector<1x8x128xf32>
    %14 = vector.shape_cast %13 : vector<1x8x128xf32> to vector<8x128xf32>
    %c0_i32_15 = arith.constant 0 : i32
    %15 = arith.index_cast %c0_i32_15 : i32 to index
    %c0_16 = arith.constant 0 : index
    %c0_17 = arith.constant 0 : index
    %16 = vector.load %arg13[%15, %c0_16, %c0_17] : memref<8x8x128xf32, #tpu.memory_space<vmem>>, vector<1x8x128xf32>
    %17 = vector.shape_cast %16 : vector<1x8x128xf32> to vector<8x128xf32>
    %cst_18 = arith.constant dense<0.000000e+00> : vector<8x128xf32>
    %18 = tpu.matmul %14, %4, %cst_18 {dimension_numbers = #tpu.dot_dimension_numbers<[1], [0], [0], [1], [0, 0, 1, 1], [], []>} : vector<8x128xf32>, vector<128x128xf32>, vector<8x128xf32> -> vector<8x128xf32>
    %19 = arith.addf %17, %18 : vector<8x128xf32>
    %20 = math.tanh %19 : vector<8x128xf32>
    %21 = arith.index_cast %c0_i32_15 : i32 to index
    %c0_19 = arith.constant 0 : index
    %c0_20 = arith.constant 0 : index
    %22 = vector.load %arg13[%21, %c0_19, %c0_20] : memref<8x8x128xf32, #tpu.memory_space<vmem>>, vector<1x8x128xf32>
    %23 = vector.shape_cast %22 : vector<1x8x128xf32> to vector<8x128xf32>
    %24 = vector.shape_cast %20 : vector<8x128xf32> to vector<1x8x128xf32>
    tpu.vector_store %arg13[%21, %c0_19, %c0_20], %24 {strides = array<i32>} : memref<8x8x128xf32, #tpu.memory_space<vmem>>, vector<1x8x128xf32>,
    %c1_i32 = arith.constant 1 : i32
    %25 = arith.index_cast %c1_i32 : i32 to index
    %c0_21 = arith.constant 0 : index
    %c0_22 = arith.constant 0 : index
    %26 = vector.load %arg13[%25, %c0_21, %c0_22] : memref<8x8x128xf32, #tpu.memory_space<vmem>>, vector<1x8x128xf32>
    %27 = vector.shape_cast %26 : vector<1x8x128xf32> to vector<8x128xf32>
    %cst_23 = arith.constant dense<0.000000e+00> : vector<8x128xf32>
    %28 = tpu.matmul %20, %4, %cst_23 {dimension_numbers = #tpu.dot_dimension_numbers<[1], [0], [0], [1], [0, 0, 1, 1], [], []>} : vector<8x128xf32>, vector<128x128xf32>, vector<8x128xf32> -> vector<8x128xf32>
    %29 = arith.addf %27, %28 : vector<8x128xf32>
    %30 = math.tanh %29 : vector<8x128xf32>
    %31 = arith.index_cast %c1_i32 : i32 to index
    %c0_24 = arith.constant 0 : index
    %c0_25 = arith.constant 0 : index
    %32 = vector.load %arg13[%31, %c0_24, %c0_25] : memref<8x8x128xf32, #tpu.memory_space<vmem>>, vector<1x8x128xf32>
    %33 = vector.shape_cast %32 : vector<1x8x128xf32> to vector<8x128xf32>
    %34 = vector.shape_cast %30 : vector<8x128xf32> to vector<1x8x128xf32>
    tpu.vector_store %arg13[%31, %c0_24, %c0_25], %34 {strides = array<i32>} : memref<8x8x128xf32, #tpu.memory_space<vmem>>, vector<1x8x128xf32>,
    %c2_i32 = arith.constant 2 : i32
    %35 = arith.index_cast %c2_i32 : i32 to index
    %c0_26 = arith.constant 0 : index
    %c0_27 = arith.constant 0 : index
    %36 = vector.load %arg13[%35, %c0_26, %c0_27] : memref<8x8x128xf32, #tpu.memory_space<vmem>>, vector<1x8x128xf32>
    %37 = vector.shape_cast %36 : vector<1x8x128xf32> to vector<8x128xf32>
    %cst_28 = arith.constant dense<0.000000e+00> : vector<8x128xf32>
    %38 = tpu.matmul %30, %4, %cst_28 {dimension_numbers = #tpu.dot_dimension_numbers<[1], [0], [0], [1], [0, 0, 1, 1], [], []>} : vector<8x128xf32>, vector<128x128xf32>, vector<8x128xf32> -> vector<8x128xf32>
    %39 = arith.addf %37, %38 : vector<8x128xf32>
    %40 = math.tanh %39 : vector<8x128xf32>
    %41 = arith.index_cast %c2_i32 : i32 to index
    %c0_29 = arith.constant 0 : index
    %c0_30 = arith.constant 0 : index
    %42 = vector.load %arg13[%41, %c0_29, %c0_30] : memref<8x8x128xf32, #tpu.memory_space<vmem>>, vector<1x8x128xf32>
    %43 = vector.shape_cast %42 : vector<1x8x128xf32> to vector<8x128xf32>
    %44 = vector.shape_cast %40 : vector<8x128xf32> to vector<1x8x128xf32>
    tpu.vector_store %arg13[%41, %c0_29, %c0_30], %44 {strides = array<i32>} : memref<8x8x128xf32, #tpu.memory_space<vmem>>, vector<1x8x128xf32>,
    %c3_i32 = arith.constant 3 : i32
    %45 = arith.index_cast %c3_i32 : i32 to index
    %c0_31 = arith.constant 0 : index
    %c0_32 = arith.constant 0 : index
    %46 = vector.load %arg13[%45, %c0_31, %c0_32] : memref<8x8x128xf32, #tpu.memory_space<vmem>>, vector<1x8x128xf32>
    %47 = vector.shape_cast %46 : vector<1x8x128xf32> to vector<8x128xf32>
    %cst_33 = arith.constant dense<0.000000e+00> : vector<8x128xf32>
    %48 = tpu.matmul %40, %4, %cst_33 {dimension_numbers = #tpu.dot_dimension_numbers<[1], [0], [0], [1], [0, 0, 1, 1], [], []>} : vector<8x128xf32>, vector<128x128xf32>, vector<8x128xf32> -> vector<8x128xf32>
    %49 = arith.addf %47, %48 : vector<8x128xf32>
    %50 = math.tanh %49 : vector<8x128xf32>
    %51 = arith.index_cast %c3_i32 : i32 to index
    %c0_34 = arith.constant 0 : index
    %c0_35 = arith.constant 0 : index
    %52 = vector.load %arg13[%51, %c0_34, %c0_35] : memref<8x8x128xf32, #tpu.memory_space<vmem>>, vector<1x8x128xf32>
    %53 = vector.shape_cast %52 : vector<1x8x128xf32> to vector<8x128xf32>
    %54 = vector.shape_cast %50 : vector<8x128xf32> to vector<1x8x128xf32>
    tpu.vector_store %arg13[%51, %c0_34, %c0_35], %54 {strides = array<i32>} : memref<8x8x128xf32, #tpu.memory_space<vmem>>, vector<1x8x128xf32>,
    %c4_i32 = arith.constant 4 : i32
    %55 = arith.index_cast %c4_i32 : i32 to index
    %c0_36 = arith.constant 0 : index
    %c0_37 = arith.constant 0 : index
    %56 = vector.load %arg13[%55, %c0_36, %c0_37] : memref<8x8x128xf32, #tpu.memory_space<vmem>>, vector<1x8x128xf32>
    %57 = vector.shape_cast %56 : vector<1x8x128xf32> to vector<8x128xf32>
    %cst_38 = arith.constant dense<0.000000e+00> : vector<8x128xf32>
    %58 = tpu.matmul %50, %4, %cst_38 {dimension_numbers = #tpu.dot_dimension_numbers<[1], [0], [0], [1], [0, 0, 1, 1], [], []>} : vector<8x128xf32>, vector<128x128xf32>, vector<8x128xf32> -> vector<8x128xf32>
    %59 = arith.addf %57, %58 : vector<8x128xf32>
    %60 = math.tanh %59 : vector<8x128xf32>
    %61 = arith.index_cast %c4_i32 : i32 to index
    %c0_39 = arith.constant 0 : index
    %c0_40 = arith.constant 0 : index
    %62 = vector.load %arg13[%61, %c0_39, %c0_40] : memref<8x8x128xf32, #tpu.memory_space<vmem>>, vector<1x8x128xf32>
    %63 = vector.shape_cast %62 : vector<1x8x128xf32> to vector<8x128xf32>
    %64 = vector.shape_cast %60 : vector<8x128xf32> to vector<1x8x128xf32>
    tpu.vector_store %arg13[%61, %c0_39, %c0_40], %64 {strides = array<i32>} : memref<8x8x128xf32, #tpu.memory_space<vmem>>, vector<1x8x128xf32>,
    %c5_i32 = arith.constant 5 : i32
    %65 = arith.index_cast %c5_i32 : i32 to index
    %c0_41 = arith.constant 0 : index
    %c0_42 = arith.constant 0 : index
    %66 = vector.load %arg13[%65, %c0_41, %c0_42] : memref<8x8x128xf32, #tpu.memory_space<vmem>>, vector<1x8x128xf32>
    %67 = vector.shape_cast %66 : vector<1x8x128xf32> to vector<8x128xf32>
    %cst_43 = arith.constant dense<0.000000e+00> : vector<8x128xf32>
    %68 = tpu.matmul %60, %4, %cst_43 {dimension_numbers = #tpu.dot_dimension_numbers<[1], [0], [0], [1], [0, 0, 1, 1], [], []>} : vector<8x128xf32>, vector<128x128xf32>, vector<8x128xf32> -> vector<8x128xf32>
    %69 = arith.addf %67, %68 : vector<8x128xf32>
    %70 = math.tanh %69 : vector<8x128xf32>
    %71 = arith.index_cast %c5_i32 : i32 to index
    %c0_44 = arith.constant 0 : index
    %c0_45 = arith.constant 0 : index
    %72 = vector.load %arg13[%71, %c0_44, %c0_45] : memref<8x8x128xf32, #tpu.memory_space<vmem>>, vector<1x8x128xf32>
    %73 = vector.shape_cast %72 : vector<1x8x128xf32> to vector<8x128xf32>
    %74 = vector.shape_cast %70 : vector<8x128xf32> to vector<1x8x128xf32>
    tpu.vector_store %arg13[%71, %c0_44, %c0_45], %74 {strides = array<i32>} : memref<8x8x128xf32, #tpu.memory_space<vmem>>, vector<1x8x128xf32>,
    %c6_i32 = arith.constant 6 : i32
    %75 = arith.index_cast %c6_i32 : i32 to index
    %c0_46 = arith.constant 0 : index
    %c0_47 = arith.constant 0 : index
    %76 = vector.load %arg13[%75, %c0_46, %c0_47] : memref<8x8x128xf32, #tpu.memory_space<vmem>>, vector<1x8x128xf32>
    %77 = vector.shape_cast %76 : vector<1x8x128xf32> to vector<8x128xf32>
    %cst_48 = arith.constant dense<0.000000e+00> : vector<8x128xf32>
    %78 = tpu.matmul %70, %4, %cst_48 {dimension_numbers = #tpu.dot_dimension_numbers<[1], [0], [0], [1], [0, 0, 1, 1], [], []>} : vector<8x128xf32>, vector<128x128xf32>, vector<8x128xf32> -> vector<8x128xf32>
    %79 = arith.addf %77, %78 : vector<8x128xf32>
    %80 = math.tanh %79 : vector<8x128xf32>
    %81 = arith.index_cast %c6_i32 : i32 to index
    %c0_49 = arith.constant 0 : index
    %c0_50 = arith.constant 0 : index
    %82 = vector.load %arg13[%81, %c0_49, %c0_50] : memref<8x8x128xf32, #tpu.memory_space<vmem>>, vector<1x8x128xf32>
    %83 = vector.shape_cast %82 : vector<1x8x128xf32> to vector<8x128xf32>
    %84 = vector.shape_cast %80 : vector<8x128xf32> to vector<1x8x128xf32>
    tpu.vector_store %arg13[%81, %c0_49, %c0_50], %84 {strides = array<i32>} : memref<8x8x128xf32, #tpu.memory_space<vmem>>, vector<1x8x128xf32>,
    %c7_i32 = arith.constant 7 : i32
    %85 = arith.index_cast %c7_i32 : i32 to index
    %c0_51 = arith.constant 0 : index
    %c0_52 = arith.constant 0 : index
    %86 = vector.load %arg13[%85, %c0_51, %c0_52] : memref<8x8x128xf32, #tpu.memory_space<vmem>>, vector<1x8x128xf32>
    %87 = vector.shape_cast %86 : vector<1x8x128xf32> to vector<8x128xf32>
    %cst_53 = arith.constant dense<0.000000e+00> : vector<8x128xf32>
    %88 = tpu.matmul %80, %4, %cst_53 {dimension_numbers = #tpu.dot_dimension_numbers<[1], [0], [0], [1], [0, 0, 1, 1], [], []>} : vector<8x128xf32>, vector<128x128xf32>, vector<8x128xf32> -> vector<8x128xf32>
    %89 = arith.addf %87, %88 : vector<8x128xf32>
    %90 = math.tanh %89 : vector<8x128xf32>
    %91 = arith.index_cast %c7_i32 : i32 to index
    %c0_54 = arith.constant 0 : index
    %c0_55 = arith.constant 0 : index
    %92 = vector.load %arg13[%91, %c0_54, %c0_55] : memref<8x8x128xf32, #tpu.memory_space<vmem>>, vector<1x8x128xf32>
    %93 = vector.shape_cast %92 : vector<1x8x128xf32> to vector<8x128xf32>
    %94 = vector.shape_cast %90 : vector<8x128xf32> to vector<1x8x128xf32>
    tpu.vector_store %arg13[%91, %c0_54, %c0_55], %94 {strides = array<i32>} : memref<8x8x128xf32, #tpu.memory_space<vmem>>, vector<1x8x128xf32>,
    %c8_i32 = arith.constant 8 : i32
    %c0_56 = arith.constant 0 : index
    %c0_57 = arith.constant 0 : index
    %c0_58 = arith.constant 0 : index
    %95 = vector.load %arg12[%c0_56, %c0_57, %c0_58] : memref<2x8x128xf32, #tpu.memory_space<vmem>>, vector<1x8x128xf32>
    %96 = vector.shape_cast %95 : vector<1x8x128xf32> to vector<8x128xf32>
    %97 = vector.shape_cast %90 : vector<8x128xf32> to vector<1x8x128xf32>
    tpu.vector_store %arg12[%c0_56, %c0_57, %c0_58], %97 {strides = array<i32>} : memref<2x8x128xf32, #tpu.memory_space<vmem>>, vector<1x8x128xf32>,
    %c0_59 = arith.constant 0 : index
    %c0_60 = arith.constant 0 : index
    %98 = vector.load %arg5[%c0_59, %c0_60] : memref<128x128xf32, #tpu.memory_space<vmem>>, vector<128x128xf32>
    %c0_61 = arith.constant 0 : index
    %c0_62 = arith.constant 0 : index
    %99 = vector.load %arg6[%c0_61, %c0_62] : memref<128x128xf32, #tpu.memory_space<vmem>>, vector<128x128xf32>
    %c0_63 = arith.constant 0 : index
    %c0_64 = arith.constant 0 : index
    %100 = vector.load %arg7[%c0_63, %c0_64] : memref<1x128xf32, #tpu.memory_space<vmem>>, vector<1x128xf32>
    %c0_65 = arith.constant 0 : index
    %c0_66 = arith.constant 0 : index
    %c0_67 = arith.constant 0 : index
    %101 = vector.load %arg13[%c0_65, %c0_66, %c0_67] : memref<8x8x128xf32, #tpu.memory_space<vmem>>, vector<8x8x128xf32>
    %102 = vector.shape_cast %101 : vector<8x8x128xf32> to vector<64x128xf32>
    %cst_68 = arith.constant dense<0.000000e+00> : vector<64x128xf32>
    %103 = tpu.matmul %102, %98, %cst_68 {dimension_numbers = #tpu.dot_dimension_numbers<[1], [0], [0], [1], [0, 0, 1, 1], [], []>} : vector<64x128xf32>, vector<128x128xf32>, vector<64x128xf32> -> vector<64x128xf32>
    %104 = vector.broadcast %100 : vector<1x128xf32> to vector<64x128xf32>
    %105 = arith.addf %103, %104 : vector<64x128xf32>
    %106 = vector.shape_cast %105 : vector<64x128xf32> to vector<8x8x128xf32>
    %c0_69 = arith.constant 0 : index
    %c0_70 = arith.constant 0 : index
    %c0_71 = arith.constant 0 : index
    %107 = vector.load %arg13[%c0_69, %c0_70, %c0_71] : memref<8x8x128xf32, #tpu.memory_space<vmem>>, vector<8x8x128xf32>
    tpu.vector_store %arg13[%c0_69, %c0_70, %c0_71], %106 {strides = array<i32>} : memref<8x8x128xf32, #tpu.memory_space<vmem>>, vector<8x8x128xf32>,
    %c1 = arith.constant 1 : index
    %c0_72 = arith.constant 0 : index
    %c0_73 = arith.constant 0 : index
    %108 = vector.load %arg12[%c1, %c0_72, %c0_73] : memref<2x8x128xf32, #tpu.memory_space<vmem>>, vector<1x8x128xf32>
    %109 = vector.shape_cast %108 : vector<1x8x128xf32> to vector<8x128xf32>
    %c0_i32_74 = arith.constant 0 : i32
    %110 = arith.index_cast %c0_i32_74 : i32 to index
    %c0_75 = arith.constant 0 : index
    %c0_76 = arith.constant 0 : index
    %111 = vector.load %arg13[%110, %c0_75, %c0_76] : memref<8x8x128xf32, #tpu.memory_space<vmem>>, vector<1x8x128xf32>
    %112 = vector.shape_cast %111 : vector<1x8x128xf32> to vector<8x128xf32>
    %cst_77 = arith.constant dense<0.000000e+00> : vector<8x128xf32>
    %113 = tpu.matmul %109, %99, %cst_77 {dimension_numbers = #tpu.dot_dimension_numbers<[1], [0], [0], [1], [0, 0, 1, 1], [], []>} : vector<8x128xf32>, vector<128x128xf32>, vector<8x128xf32> -> vector<8x128xf32>
    %114 = arith.addf %112, %113 : vector<8x128xf32>
    %115 = math.tanh %114 : vector<8x128xf32>
    %116 = arith.index_cast %c0_i32_74 : i32 to index
    %c0_78 = arith.constant 0 : index
    %c0_79 = arith.constant 0 : index
    %117 = vector.load %arg13[%116, %c0_78, %c0_79] : memref<8x8x128xf32, #tpu.memory_space<vmem>>, vector<1x8x128xf32>
    %118 = vector.shape_cast %117 : vector<1x8x128xf32> to vector<8x128xf32>
    %119 = vector.shape_cast %115 : vector<8x128xf32> to vector<1x8x128xf32>
    tpu.vector_store %arg13[%116, %c0_78, %c0_79], %119 {strides = array<i32>} : memref<8x8x128xf32, #tpu.memory_space<vmem>>, vector<1x8x128xf32>,
    %c1_i32_80 = arith.constant 1 : i32
    %120 = arith.index_cast %c1_i32_80 : i32 to index
    %c0_81 = arith.constant 0 : index
    %c0_82 = arith.constant 0 : index
    %121 = vector.load %arg13[%120, %c0_81, %c0_82] : memref<8x8x128xf32, #tpu.memory_space<vmem>>, vector<1x8x128xf32>
    %122 = vector.shape_cast %121 : vector<1x8x128xf32> to vector<8x128xf32>
    %cst_83 = arith.constant dense<0.000000e+00> : vector<8x128xf32>
    %123 = tpu.matmul %115, %99, %cst_83 {dimension_numbers = #tpu.dot_dimension_numbers<[1], [0], [0], [1], [0, 0, 1, 1], [], []>} : vector<8x128xf32>, vector<128x128xf32>, vector<8x128xf32> -> vector<8x128xf32>
    %124 = arith.addf %122, %123 : vector<8x128xf32>
    %125 = math.tanh %124 : vector<8x128xf32>
    %126 = arith.index_cast %c1_i32_80 : i32 to index
    %c0_84 = arith.constant 0 : index
    %c0_85 = arith.constant 0 : index
    %127 = vector.load %arg13[%126, %c0_84, %c0_85] : memref<8x8x128xf32, #tpu.memory_space<vmem>>, vector<1x8x128xf32>
    %128 = vector.shape_cast %127 : vector<1x8x128xf32> to vector<8x128xf32>
    %129 = vector.shape_cast %125 : vector<8x128xf32> to vector<1x8x128xf32>
    tpu.vector_store %arg13[%126, %c0_84, %c0_85], %129 {strides = array<i32>} : memref<8x8x128xf32, #tpu.memory_space<vmem>>, vector<1x8x128xf32>,
    %c2_i32_86 = arith.constant 2 : i32
    %130 = arith.index_cast %c2_i32_86 : i32 to index
    %c0_87 = arith.constant 0 : index
    %c0_88 = arith.constant 0 : index
    %131 = vector.load %arg13[%130, %c0_87, %c0_88] : memref<8x8x128xf32, #tpu.memory_space<vmem>>, vector<1x8x128xf32>
    %132 = vector.shape_cast %131 : vector<1x8x128xf32> to vector<8x128xf32>
    %cst_89 = arith.constant dense<0.000000e+00> : vector<8x128xf32>
    %133 = tpu.matmul %125, %99, %cst_89 {dimension_numbers = #tpu.dot_dimension_numbers<[1], [0], [0], [1], [0, 0, 1, 1], [], []>} : vector<8x128xf32>, vector<128x128xf32>, vector<8x128xf32> -> vector<8x128xf32>
    %134 = arith.addf %132, %133 : vector<8x128xf32>
    %135 = math.tanh %134 : vector<8x128xf32>
    %136 = arith.index_cast %c2_i32_86 : i32 to index
    %c0_90 = arith.constant 0 : index
    %c0_91 = arith.constant 0 : index
    %137 = vector.load %arg13[%136, %c0_90, %c0_91] : memref<8x8x128xf32, #tpu.memory_space<vmem>>, vector<1x8x128xf32>
    %138 = vector.shape_cast %137 : vector<1x8x128xf32> to vector<8x128xf32>
    %139 = vector.shape_cast %135 : vector<8x128xf32> to vector<1x8x128xf32>
    tpu.vector_store %arg13[%136, %c0_90, %c0_91], %139 {strides = array<i32>} : memref<8x8x128xf32, #tpu.memory_space<vmem>>, vector<1x8x128xf32>,
    %c3_i32_92 = arith.constant 3 : i32
    %140 = arith.index_cast %c3_i32_92 : i32 to index
    %c0_93 = arith.constant 0 : index
    %c0_94 = arith.constant 0 : index
    %141 = vector.load %arg13[%140, %c0_93, %c0_94] : memref<8x8x128xf32, #tpu.memory_space<vmem>>, vector<1x8x128xf32>
    %142 = vector.shape_cast %141 : vector<1x8x128xf32> to vector<8x128xf32>
    %cst_95 = arith.constant dense<0.000000e+00> : vector<8x128xf32>
    %143 = tpu.matmul %135, %99, %cst_95 {dimension_numbers = #tpu.dot_dimension_numbers<[1], [0], [0], [1], [0, 0, 1, 1], [], []>} : vector<8x128xf32>, vector<128x128xf32>, vector<8x128xf32> -> vector<8x128xf32>
    %144 = arith.addf %142, %143 : vector<8x128xf32>
    %145 = math.tanh %144 : vector<8x128xf32>
    %146 = arith.index_cast %c3_i32_92 : i32 to index
    %c0_96 = arith.constant 0 : index
    %c0_97 = arith.constant 0 : index
    %147 = vector.load %arg13[%146, %c0_96, %c0_97] : memref<8x8x128xf32, #tpu.memory_space<vmem>>, vector<1x8x128xf32>
    %148 = vector.shape_cast %147 : vector<1x8x128xf32> to vector<8x128xf32>
    %149 = vector.shape_cast %145 : vector<8x128xf32> to vector<1x8x128xf32>
    tpu.vector_store %arg13[%146, %c0_96, %c0_97], %149 {strides = array<i32>} : memref<8x8x128xf32, #tpu.memory_space<vmem>>, vector<1x8x128xf32>,
    %c4_i32_98 = arith.constant 4 : i32
    %150 = arith.index_cast %c4_i32_98 : i32 to index
    %c0_99 = arith.constant 0 : index
    %c0_100 = arith.constant 0 : index
    %151 = vector.load %arg13[%150, %c0_99, %c0_100] : memref<8x8x128xf32, #tpu.memory_space<vmem>>, vector<1x8x128xf32>
    %152 = vector.shape_cast %151 : vector<1x8x128xf32> to vector<8x128xf32>
    %cst_101 = arith.constant dense<0.000000e+00> : vector<8x128xf32>
    %153 = tpu.matmul %145, %99, %cst_101 {dimension_numbers = #tpu.dot_dimension_numbers<[1], [0], [0], [1], [0, 0, 1, 1], [], []>} : vector<8x128xf32>, vector<128x128xf32>, vector<8x128xf32> -> vector<8x128xf32>
    %154 = arith.addf %152, %153 : vector<8x128xf32>
    %155 = math.tanh %154 : vector<8x128xf32>
    %156 = arith.index_cast %c4_i32_98 : i32 to index
    %c0_102 = arith.constant 0 : index
    %c0_103 = arith.constant 0 : index
    %157 = vector.load %arg13[%156, %c0_102, %c0_103] : memref<8x8x128xf32, #tpu.memory_space<vmem>>, vector<1x8x128xf32>
    %158 = vector.shape_cast %157 : vector<1x8x128xf32> to vector<8x128xf32>
    %159 = vector.shape_cast %155 : vector<8x128xf32> to vector<1x8x128xf32>
    tpu.vector_store %arg13[%156, %c0_102, %c0_103], %159 {strides = array<i32>} : memref<8x8x128xf32, #tpu.memory_space<vmem>>, vector<1x8x128xf32>,
    %c5_i32_104 = arith.constant 5 : i32
    %160 = arith.index_cast %c5_i32_104 : i32 to index
    %c0_105 = arith.constant 0 : index
    %c0_106 = arith.constant 0 : index
    %161 = vector.load %arg13[%160, %c0_105, %c0_106] : memref<8x8x128xf32, #tpu.memory_space<vmem>>, vector<1x8x128xf32>
    %162 = vector.shape_cast %161 : vector<1x8x128xf32> to vector<8x128xf32>
    %cst_107 = arith.constant dense<0.000000e+00> : vector<8x128xf32>
    %163 = tpu.matmul %155, %99, %cst_107 {dimension_numbers = #tpu.dot_dimension_numbers<[1], [0], [0], [1], [0, 0, 1, 1], [], []>} : vector<8x128xf32>, vector<128x128xf32>, vector<8x128xf32> -> vector<8x128xf32>
    %164 = arith.addf %162, %163 : vector<8x128xf32>
    %165 = math.tanh %164 : vector<8x128xf32>
    %166 = arith.index_cast %c5_i32_104 : i32 to index
    %c0_108 = arith.constant 0 : index
    %c0_109 = arith.constant 0 : index
    %167 = vector.load %arg13[%166, %c0_108, %c0_109] : memref<8x8x128xf32, #tpu.memory_space<vmem>>, vector<1x8x128xf32>
    %168 = vector.shape_cast %167 : vector<1x8x128xf32> to vector<8x128xf32>
    %169 = vector.shape_cast %165 : vector<8x128xf32> to vector<1x8x128xf32>
    tpu.vector_store %arg13[%166, %c0_108, %c0_109], %169 {strides = array<i32>} : memref<8x8x128xf32, #tpu.memory_space<vmem>>, vector<1x8x128xf32>,
    %c6_i32_110 = arith.constant 6 : i32
    %170 = arith.index_cast %c6_i32_110 : i32 to index
    %c0_111 = arith.constant 0 : index
    %c0_112 = arith.constant 0 : index
    %171 = vector.load %arg13[%170, %c0_111, %c0_112] : memref<8x8x128xf32, #tpu.memory_space<vmem>>, vector<1x8x128xf32>
    %172 = vector.shape_cast %171 : vector<1x8x128xf32> to vector<8x128xf32>
    %cst_113 = arith.constant dense<0.000000e+00> : vector<8x128xf32>
    %173 = tpu.matmul %165, %99, %cst_113 {dimension_numbers = #tpu.dot_dimension_numbers<[1], [0], [0], [1], [0, 0, 1, 1], [], []>} : vector<8x128xf32>, vector<128x128xf32>, vector<8x128xf32> -> vector<8x128xf32>
    %174 = arith.addf %172, %173 : vector<8x128xf32>
    %175 = math.tanh %174 : vector<8x128xf32>
    %176 = arith.index_cast %c6_i32_110 : i32 to index
    %c0_114 = arith.constant 0 : index
    %c0_115 = arith.constant 0 : index
    %177 = vector.load %arg13[%176, %c0_114, %c0_115] : memref<8x8x128xf32, #tpu.memory_space<vmem>>, vector<1x8x128xf32>
    %178 = vector.shape_cast %177 : vector<1x8x128xf32> to vector<8x128xf32>
    %179 = vector.shape_cast %175 : vector<8x128xf32> to vector<1x8x128xf32>
    tpu.vector_store %arg13[%176, %c0_114, %c0_115], %179 {strides = array<i32>} : memref<8x8x128xf32, #tpu.memory_space<vmem>>, vector<1x8x128xf32>,
    %c7_i32_116 = arith.constant 7 : i32
    %180 = arith.index_cast %c7_i32_116 : i32 to index
    %c0_117 = arith.constant 0 : index
    %c0_118 = arith.constant 0 : index
    %181 = vector.load %arg13[%180, %c0_117, %c0_118] : memref<8x8x128xf32, #tpu.memory_space<vmem>>, vector<1x8x128xf32>
    %182 = vector.shape_cast %181 : vector<1x8x128xf32> to vector<8x128xf32>
    %cst_119 = arith.constant dense<0.000000e+00> : vector<8x128xf32>
    %183 = tpu.matmul %175, %99, %cst_119 {dimension_numbers = #tpu.dot_dimension_numbers<[1], [0], [0], [1], [0, 0, 1, 1], [], []>} : vector<8x128xf32>, vector<128x128xf32>, vector<8x128xf32> -> vector<8x128xf32>
    %184 = arith.addf %182, %183 : vector<8x128xf32>
    %185 = math.tanh %184 : vector<8x128xf32>
    %186 = arith.index_cast %c7_i32_116 : i32 to index
    %c0_120 = arith.constant 0 : index
    %c0_121 = arith.constant 0 : index
    %187 = vector.load %arg13[%186, %c0_120, %c0_121] : memref<8x8x128xf32, #tpu.memory_space<vmem>>, vector<1x8x128xf32>
    %188 = vector.shape_cast %187 : vector<1x8x128xf32> to vector<8x128xf32>
    %189 = vector.shape_cast %185 : vector<8x128xf32> to vector<1x8x128xf32>
    tpu.vector_store %arg13[%186, %c0_120, %c0_121], %189 {strides = array<i32>} : memref<8x8x128xf32, #tpu.memory_space<vmem>>, vector<1x8x128xf32>,
    %c8_i32_122 = arith.constant 8 : i32
    %c1_123 = arith.constant 1 : index
    %c0_124 = arith.constant 0 : index
    %c0_125 = arith.constant 0 : index
    %190 = vector.load %arg12[%c1_123, %c0_124, %c0_125] : memref<2x8x128xf32, #tpu.memory_space<vmem>>, vector<1x8x128xf32>
    %191 = vector.shape_cast %190 : vector<1x8x128xf32> to vector<8x128xf32>
    %192 = vector.shape_cast %185 : vector<8x128xf32> to vector<1x8x128xf32>
    tpu.vector_store %arg12[%c1_123, %c0_124, %c0_125], %192 {strides = array<i32>} : memref<2x8x128xf32, #tpu.memory_space<vmem>>, vector<1x8x128xf32>,
    %c0_126 = arith.constant 0 : index
    %c0_127 = arith.constant 0 : index
    %c0_128 = arith.constant 0 : index
    %193 = vector.load %arg13[%c0_126, %c0_127, %c0_128] : memref<8x8x128xf32, #tpu.memory_space<vmem>>, vector<8x8x128xf32>
    %194 = vector.shape_cast %193 : vector<8x8x128xf32> to vector<64x128xf32>
    %c0_129 = arith.constant 0 : index
    %c0_130 = arith.constant 0 : index
    %195 = vector.load %arg8[%c0_129, %c0_130] : memref<128x128xf32, #tpu.memory_space<vmem>>, vector<128x128xf32>
    %cst_131 = arith.constant dense<0.000000e+00> : vector<64x128xf32>
    %196 = tpu.matmul %194, %195, %cst_131 {dimension_numbers = #tpu.dot_dimension_numbers<[1], [0], [0], [1], [0, 0, 1, 1], [], []>} : vector<64x128xf32>, vector<128x128xf32>, vector<64x128xf32> -> vector<64x128xf32>
    %c0_132 = arith.constant 0 : index
    %c0_133 = arith.constant 0 : index
    %197 = vector.load %arg9[%c0_132, %c0_133] : memref<1x128xf32, #tpu.memory_space<vmem>>, vector<1x128xf32>
    %198 = vector.broadcast %197 : vector<1x128xf32> to vector<64x128xf32>
    %199 = arith.addf %196, %198 : vector<64x128xf32>
    %200 = vector.shape_cast %199 : vector<64x128xf32> to vector<8x8x128xf32>
    %c0_134 = arith.constant 0 : index
    %c0_135 = arith.constant 0 : index
    %c0_136 = arith.constant 0 : index
    %201 = vector.load %arg10[%c0_134, %c0_135, %c0_136] : memref<8x8x128xf32, #tpu.memory_space<vmem>>, vector<8x8x128xf32>
    tpu.vector_store %arg10[%c0_134, %c0_135, %c0_136], %200 {strides = array<i32>} : memref<8x8x128xf32, #tpu.memory_space<vmem>>, vector<8x8x128xf32>,
    %c0_i32_137 = arith.constant 0 : i32
    %202 = arith.cmpi eq, %arg0, %c0_i32_137 : i32
    %203 = arith.extui %202 : i1 to i32
    %c0_i32_138 = arith.constant 0 : i32
    %204 = arith.cmpi ne, %203, %c0_i32_138 : i32
    scf.if %204 {
      %c0_139 = arith.constant 0 : index
      %c0_140 = arith.constant 0 : index
      %c0_141 = arith.constant 0 : index
      %205 = vector.load %arg12[%c0_139, %c0_140, %c0_141] : memref<2x8x128xf32, #tpu.memory_space<vmem>>, vector<2x8x128xf32>
      %c0_142 = arith.constant 0 : index
      %c0_143 = arith.constant 0 : index
      %c0_144 = arith.constant 0 : index
      %206 = vector.load %arg11[%c0_142, %c0_143, %c0_144] : memref<2x8x128xf32, #tpu.memory_space<vmem>>, vector<2x8x128xf32>
      tpu.vector_store %arg11[%c0_142, %c0_143, %c0_144], %205 {strides = array<i32>} : memref<2x8x128xf32, #tpu.memory_space<vmem>>, vector<2x8x128xf32>,
    } else {
    }
    return
  }
  func.func @transform_0(%arg0: i32) -> (i32, i32, i32) {
    %c0_i32 = arith.constant 0 : i32
    %c0_i32_0 = arith.constant 0 : i32
    %c0_i32_1 = arith.constant 0 : i32
    return %arg0, %c0_i32, %c0_i32_0 : i32, i32, i32
  }
  func.func @transform_1(%arg0: i32) -> (i32, i32) {
    %c0_i32 = arith.constant 0 : i32
    %c0_i32_0 = arith.constant 0 : i32
    %c0_i32_1 = arith.constant 0 : i32
    return %c0_i32, %c0_i32_0 : i32, i32
  }
  func.func @transform_2(%arg0: i32) -> (i32, i32) {
    %c0_i32 = arith.constant 0 : i32
    %c0_i32_0 = arith.constant 0 : i32
    %c0_i32_1 = arith.constant 0 : i32
    return %c0_i32, %c0_i32_0 : i32, i32
  }
  func.func @transform_3(%arg0: i32) -> (i32, i32) {
    %c0_i32 = arith.constant 0 : i32
    %c0_i32_0 = arith.constant 0 : i32
    %c0_i32_1 = arith.constant 0 : i32
    return %c0_i32, %c0_i32_0 : i32, i32
  }
  func.func @transform_4(%arg0: i32) -> (i32, i32) {
    %c0_i32 = arith.constant 0 : i32
    %c0_i32_0 = arith.constant 0 : i32
    %c0_i32_1 = arith.constant 0 : i32
    return %c0_i32, %c0_i32_0 : i32, i32
  }
  func.func @transform_5(%arg0: i32) -> (i32, i32) {
    %c0_i32 = arith.constant 0 : i32
    %c0_i32_0 = arith.constant 0 : i32
    %c0_i32_1 = arith.constant 0 : i32
    return %c0_i32, %c0_i32_0 : i32, i32
  }
  func.func @transform_6(%arg0: i32) -> (i32, i32) {
    %c0_i32 = arith.constant 0 : i32
    %c0_i32_0 = arith.constant 0 : i32
    %c0_i32_1 = arith.constant 0 : i32
    return %c0_i32, %c0_i32_0 : i32, i32
  }
  func.func @transform_7(%arg0: i32) -> (i32, i32) {
    %c0_i32 = arith.constant 0 : i32
    %c0_i32_0 = arith.constant 0 : i32
    %c0_i32_1 = arith.constant 0 : i32
    return %c0_i32, %c0_i32_0 : i32, i32
  }
  func.func @transform_8(%arg0: i32) -> (i32, i32) {
    %c0_i32 = arith.constant 0 : i32
    %c0_i32_0 = arith.constant 0 : i32
    %c0_i32_1 = arith.constant 0 : i32
    return %c0_i32, %c0_i32_0 : i32, i32
  }
  func.func @transform_9(%arg0: i32) -> (i32, i32, i32) {
    %c0_i32 = arith.constant 0 : i32
    %c0_i32_0 = arith.constant 0 : i32
    %c0_i32_1 = arith.constant 0 : i32
    return %arg0, %c0_i32, %c0_i32_0 : i32, i32, i32
  }
  func.func @transform_10(%arg0: i32) -> (i32, i32, i32) {
    %c0_i32 = arith.constant 0 : i32
    %c0_i32_0 = arith.constant 0 : i32
    %c0_i32_1 = arith.constant 0 : i32
    %c0_i32_2 = arith.constant 0 : i32
    return %c0_i32, %c0_i32_0, %c0_i32_1 : i32, i32, i32
  }
}

</mosaic_0001>

<llo_original>
// kernel: tpu_custom_call.1
$region0: #{tpu_custom_call.1}
  #allocation0 [shape = 'u32[]', space=smem, size = 0x4, offset = 0x4, fixed_abs, tag = 'smem constant byte address 0x4 - core index']
  #allocation1 [shape = 'u32[72,128]{1,0:T(1,128)}', space=vmem, size = 0x9000, scoped, tag = 'internal scratch']
  #allocation2 [shape = 'f32[2,8,128]{2,1,0:T(8,128)}', space=vmem, size = 0x2000, scoped, tag = 'scratch operand']
  #allocation3 [shape = 'f32[8,8,128]{2,1,0:T(8,128)}', space=vmem, size = 0x8000, scoped, tag = 'scratch operand']
  %s0 = inlined_call_operand.hbm [shape: f32[8,8,128], index: 0, kind: input, shape index: {}]
  %s1 = inlined_call_operand.hbm [shape: f32[128,128], index: 1, kind: input, shape index: {}]
  %s2 = inlined_call_operand.hbm [shape: f32[128,128], index: 2, kind: input, shape index: {}]
  %s3 = inlined_call_operand.vmem [shape: f32[1,128], index: 3, kind: input, shape index: {}]
  %s4 = inlined_call_operand.hbm [shape: f32[128,128], index: 4, kind: input, shape index: {}]
  %s5 = inlined_call_operand.hbm [shape: f32[128,128], index: 5, kind: input, shape index: {}]
  %s6 = inlined_call_operand.vmem [shape: f32[1,128], index: 6, kind: input, shape index: {}]
  %s7 = inlined_call_operand.hbm [shape: f32[128,128], index: 7, kind: input, shape index: {}]
  %s8 = inlined_call_operand.vmem [shape: f32[1,128], index: 8, kind: input, shape index: {}]
  %s9 = inlined_call_operand.hbm [shape: f32[8,8,128], index: 9, kind: output, shape index: {0}]
  %s10 = inlined_call_operand.hbm [shape: f32[2,8,128], index: 10, kind: output, shape index: {1}]
  %11 = xla_tuple %s9, %s10
  %s12 = sld [smem:[#allocation0]]
  $region86: #{tpu_custom_call.1} parent=0
    _
  %s14 = ssub.s32 1, %s12
  %s15 = scalar_select 0, %s14, %s12
  $region1: #{tpu_custom_call.1} parent=0
    #allocation4 [shape = 'u8[32768]{0}', space=vmem, size = 0x8000, scoped, tag = 'input window, operand 0, single buffered']
    #allocation5 [shape = 's32[1]{0}', space=sflag, size = 0x4, scoped, tag = 'scoped memory for tpu_custom_call.1']
    #allocation6 [shape = 's32[1]{0}', space=sflag, size = 0x4, scoped, tag = 'scoped memory for tpu_custom_call.1']
    #allocation7 [shape = 'u8[65536]{0}', space=vmem, size = 0x10000, scoped, tag = 'input window, operand 1, single buffered']
    #allocation8 [shape = 's32[1]{0}', space=sflag, size = 0x4, scoped, tag = 'scoped memory for tpu_custom_call.1']
    #allocation9 [shape = 'u8[65536]{0}', space=vmem, size = 0x10000, scoped, tag = 'input window, operand 2, single buffered']
    #allocation10 [shape = 'u8[65536]{0}', space=vmem, size = 0x10000, scoped, tag = 'input window, operand 4, single buffered']
    #allocation11 [shape = 's32[1]{0}', space=sflag, size = 0x4, scoped, tag = 'scoped memory for tpu_custom_call.1']
    #allocation12 [shape = 'u8[65536]{0}', space=vmem, size = 0x10000, scoped, tag = 'input window, operand 5, single buffered']
    #allocation13 [shape = 'u8[65536]{0}', space=vmem, size = 0x10000, scoped, tag = 'input window, operand 7, single buffered']
    #allocation14 [shape = 's32[1]{0}', space=sflag, size = 0x4, scoped, tag = 'scoped memory for tpu_custom_call.1']
    #allocation15 [shape = 'u8[32768]{0}', space=vmem, size = 0x8000, scoped, tag = 'output window, operand 0, single buffered']
    #allocation16 [shape = 'u8[8192]{0}', space=vmem, size = 0x2000, scoped, tag = 'output window, operand 1, single buffered']
    #allocation17 [shape = 's32[1]{0}', space=sflag, size = 0x4, scoped, tag = 'scoped memory for tpu_custom_call.1']
    %16 = vsyncpa [#allocation5], 0
    %17 = vsyncpa [#allocation8], 0
    %18 = vsyncpa [#allocation11], 0
    %19 = vsyncpa [#allocation14], 0
    %20 = vsyncpa [#allocation6], 0
    %21 = vsyncpa [#allocation17], 0
    // Predicated region
    $region2: #{tpu_custom_call.1} parent=1 // pred_check
      _
    $region3: #{tpu_custom_call.1} parent=1 // pred_check_branch
      %23 = sbr.rel (0) target = $region5
    $region4: #{tpu_custom_call.1} parent=1 // pred_region
      %25 = vsyncadd [#allocation5], 0
      %s26 = sshll.u32 %s0, 4
      %s27 = int_to_ptr.hbm [resolvable:$true] %s26
      %s28 = sshll.u32 [#allocation4], 4
      %s29 = int_to_ptr.vmem [resolvable:$true] %s28
      %34 = dma.hbm_to_vmem [thread:$0]  %s27, 1024, %s29, [#allocation5], 128, 128, 8
    $region5: #{tpu_custom_call.1} parent=1 // pred_fallthru
      _
    // Predicated region
    $region6: #{tpu_custom_call.1} parent=1 // pred_check
      _
    $region7: #{tpu_custom_call.1} parent=1 // pred_check_branch
      %36 = sbr.rel (0) target = $region9
    $region8: #{tpu_custom_call.1} parent=1 // pred_region
      %38 = vsyncadd [#allocation8], 0
      %s39 = sshll.u32 %s1, 4
      %s40 = int_to_ptr.hbm [resolvable:$true] %s39
      %s41 = sshll.u32 [#allocation7], 4
      %s42 = int_to_ptr.vmem [resolvable:$true] %s41
      %47 = dma.hbm_to_vmem [thread:$0]  %s40, 2048, %s42, [#allocation8], 128, 128, 8
    $region9: #{tpu_custom_call.1} parent=1 // pred_fallthru
      _
    // Predicated region
    $region10: #{tpu_custom_call.1} parent=1 // pred_check
      _
    $region11: #{tpu_custom_call.1} parent=1 // pred_check_branch
      %49 = sbr.rel (0) target = $region13
    $region12: #{tpu_custom_call.1} parent=1 // pred_region
      %51 = vsyncadd [#allocation8], 0
      %s52 = sshll.u32 %s2, 4
      %s53 = int_to_ptr.hbm [resolvable:$true] %s52
      %s54 = sshll.u32 [#allocation9], 4
      %s55 = int_to_ptr.vmem [resolvable:$true] %s54
      %60 = dma.hbm_to_vmem [thread:$0]  %s53, 2048, %s55, [#allocation8], 128, 128, 8
    $region13: #{tpu_custom_call.1} parent=1 // pred_fallthru
      _
    // Predicated region
    $region14: #{tpu_custom_call.1} parent=1 // pred_check
      _
    $region15: #{tpu_custom_call.1} parent=1 // pred_check_branch
      %62 = sbr.rel (0) target = $region17
    $region16: #{tpu_custom_call.1} parent=1 // pred_region
      _
    $region17: #{tpu_custom_call.1} parent=1 // pred_fallthru
      _
    // Predicated region
    $region18: #{tpu_custom_call.1} parent=1 // pred_check
      _
    $region19: #{tpu_custom_call.1} parent=1 // pred_check_branch
      %64 = sbr.rel (0) target = $region21
    $region20: #{tpu_custom_call.1} parent=1 // pred_region
      %66 = vsyncadd [#allocation11], 0
      %s67 = sshll.u32 %s4, 4
      %s68 = int_to_ptr.hbm [resolvable:$true] %s67
      %s69 = sshll.u32 [#allocation10], 4
      %s70 = int_to_ptr.vmem [resolvable:$true] %s69
      %75 = dma.hbm_to_vmem [thread:$0]  %s68, 2048, %s70, [#allocation11], 128, 128, 8
    $region21: #{tpu_custom_call.1} parent=1 // pred_fallthru
      _
    // Predicated region
    $region22: #{tpu_custom_call.1} parent=1 // pred_check
      _
    $region23: #{tpu_custom_call.1} parent=1 // pred_check_branch
      %77 = sbr.rel (0) target = $region25
    $region24: #{tpu_custom_call.1} parent=1 // pred_region
      %79 = vsyncadd [#allocation11], 0
      %s80 = sshll.u32 %s5, 4
      %s81 = int_to_ptr.hbm [resolvable:$true] %s80
      %s82 = sshll.u32 [#allocation12], 4
      %s83 = int_to_ptr.vmem [resolvable:$true] %s82
      %88 = dma.hbm_to_vmem [thread:$0]  %s81, 2048, %s83, [#allocation11], 128, 128, 8
    $region25: #{tpu_custom_call.1} parent=1 // pred_fallthru
      _
    // Predicated region
    $region26: #{tpu_custom_call.1} parent=1 // pred_check
      _
    $region27: #{tpu_custom_call.1} parent=1 // pred_check_branch
      %90 = sbr.rel (0) target = $region29
    $region28: #{tpu_custom_call.1} parent=1 // pred_region
      _
    $region29: #{tpu_custom_call.1} parent=1 // pred_fallthru
      _
    // Predicated region
    $region30: #{tpu_custom_call.1} parent=1 // pred_check
      _
    $region31: #{tpu_custom_call.1} parent=1 // pred_check_branch
      %92 = sbr.rel (0) target = $region33
    $region32: #{tpu_custom_call.1} parent=1 // pred_region
      %94 = vsyncadd [#allocation14], 0
      %s95 = sshll.u32 %s7, 4
      %s96 = int_to_ptr.hbm [resolvable:$true] %s95
      %s97 = sshll.u32 [#allocation13], 4
      %s98 = int_to_ptr.vmem [resolvable:$true] %s97
      %103 = dma.hbm_to_vmem [thread:$0]  %s96, 2048, %s98, [#allocation14], 128, 128, 8
    $region33: #{tpu_custom_call.1} parent=1 // pred_fallthru
      _
    // Predicated region
    $region34: #{tpu_custom_call.1} parent=1 // pred_check
      _
    $region35: #{tpu_custom_call.1} parent=1 // pred_check_branch
      %105 = sbr.rel (0) target = $region37
    $region36: #{tpu_custom_call.1} parent=1 // pred_region
      _
    $region37: #{tpu_custom_call.1} parent=1 // pred_fallthru
      _
    // Predicated region
    $region38: #{tpu_custom_call.1} parent=1 // pred_check
      _
    $region39: #{tpu_custom_call.1} parent=1 // pred_check_branch
      %107 = sbr.rel (0) target = $region41
    $region40: #{tpu_custom_call.1} parent=1 // pred_region
      %109 = dma.done [#allocation5], 1024
    $region41: #{tpu_custom_call.1} parent=1 // pred_fallthru
      _
    // Predicated region
    $region42: #{tpu_custom_call.1} parent=1 // pred_check
      _
    $region43: #{tpu_custom_call.1} parent=1 // pred_check_branch
      %111 = sbr.rel (0) target = $region45
    $region44: #{tpu_custom_call.1} parent=1 // pred_region
      %113 = dma.done [#allocation8], 2048
    $region45: #{tpu_custom_call.1} parent=1 // pred_fallthru
      _
    // Predicated region
    $region46: #{tpu_custom_call.1} parent=1 // pred_check
      _
    $region47: #{tpu_custom_call.1} parent=1 // pred_check_branch
      %115 = sbr.rel (0) target = $region49
    $region48: #{tpu_custom_call.1} parent=1 // pred_region
      %117 = dma.done [#allocation8], 2048
    $region49: #{tpu_custom_call.1} parent=1 // pred_fallthru
      _
    // Predicated region
    $region50: #{tpu_custom_call.1} parent=1 // pred_check
      _
    $region51: #{tpu_custom_call.1} parent=1 // pred_check_branch
      %119 = sbr.rel (0) target = $region53
    $region52: #{tpu_custom_call.1} parent=1 // pred_region
      %121 = dma.done [#allocation11], 2048
    $region53: #{tpu_custom_call.1} parent=1 // pred_fallthru
      _
    // Predicated region
    $region54: #{tpu_custom_call.1} parent=1 // pred_check
      _
    $region55: #{tpu_custom_call.1} parent=1 // pred_check_branch
      %123 = sbr.rel (0) target = $region57
    $region56: #{tpu_custom_call.1} parent=1 // pred_region
      %125 = dma.done [#allocation11], 2048
    $region57: #{tpu_custom_call.1} parent=1 // pred_fallthru
      _
    // Predicated region
    $region58: #{tpu_custom_call.1} parent=1 // pred_check
      _
    $region59: #{tpu_custom_call.1} parent=1 // pred_check_branch
      %127 = sbr.rel (0) target = $region61
    $region60: #{tpu_custom_call.1} parent=1 // pred_region
      %129 = dma.done [#allocation14], 2048
    $region61: #{tpu_custom_call.1} parent=1 // pred_fallthru
      _
    %p130 = scmp.eq.s32.totalorder 0, 0
    // Predicated region
    $region62: #{tpu_custom_call.1} parent=1 // pred_check
      %p131 = pneg %p130
    $region63: #{tpu_custom_call.1} parent=1 // pred_check_branch
      %133 = sbr.rel (%p131) target = $region65
    $region64: #{tpu_custom_call.1} parent=1 // pred_region
      %134 = vst [vmem:[#allocation2] sm:$0xff] 0.0
      %135 = vst [vmem:[#allocation2 + $0x8] sm:$0xff] 0.0
    $region65: #{tpu_custom_call.1} parent=1 // pred_fallthru
      _
    %v136 = vld [vmem:[#allocation7] sm:$0xff]
    %v137 = vld [vmem:[#allocation7 + $0x8] sm:$0xff]
    %v138 = vld [vmem:[#allocation7 + $0x10] sm:$0xff]
    %v139 = vld [vmem:[#allocation7 + $0x18] sm:$0xff]
    %v140 = vld [vmem:[#allocation7 + $0x20] sm:$0xff]
    %v141 = vld [vmem:[#allocation7 + $0x28] sm:$0xff]
    %v142 = vld [vmem:[#allocation7 + $0x30] sm:$0xff]
    %v143 = vld [vmem:[#allocation7 + $0x38] sm:$0xff]
    %v144 = vld [vmem:[#allocation7 + $0x40] sm:$0xff]
    %v145 = vld [vmem:[#allocation7 + $0x48] sm:$0xff]
    %v146 = vld [vmem:[#allocation7 + $0x50] sm:$0xff]
    %v147 = vld [vmem:[#allocation7 + $0x58] sm:$0xff]
    %v148 = vld [vmem:[#allocation7 + $0x60] sm:$0xff]
    %v149 = vld [vmem:[#allocation7 + $0x68] sm:$0xff]
    %v150 = vld [vmem:[#allocation7 + $0x70] sm:$0xff]
    %v151 = vld [vmem:[#allocation7 + $0x78] sm:$0xff]
    %v152 = vld [vmem:[#allocation9] sm:$0xff]
    %v153 = vld [vmem:[#allocation9 + $0x8] sm:$0xff]
    %v154 = vld [vmem:[#allocation9 + $0x10] sm:$0xff]
    %v155 = vld [vmem:[#allocation9 + $0x18] sm:$0xff]
    %v156 = vld [vmem:[#allocation9 + $0x20] sm:$0xff]
    %v157 = vld [vmem:[#allocation9 + $0x28] sm:$0xff]
    %v158 = vld [vmem:[#allocation9 + $0x30] sm:$0xff]
    %v159 = vld [vmem:[#allocation9 + $0x38] sm:$0xff]
    %v160 = vld [vmem:[#allocation9 + $0x40] sm:$0xff]
    %v161 = vld [vmem:[#allocation9 + $0x48] sm:$0xff]
    %v162 = vld [vmem:[#allocation9 + $0x50] sm:$0xff]
    %v163 = vld [vmem:[#allocation9 + $0x58] sm:$0xff]
    %v164 = vld [vmem:[#allocation9 + $0x60] sm:$0xff]
    %v165 = vld [vmem:[#allocation9 + $0x68] sm:$0xff]
    %v166 = vld [vmem:[#allocation9 + $0x70] sm:$0xff]
    %v167 = vld [vmem:[#allocation9 + $0x78] sm:$0xff]
    %v168 = vld [vmem:[%s3] sm:$0x1]
    %v169 = vld [vmem:[#allocation4] sm:$0xff]
    %v170 = vld [vmem:[#allocation4 + $0x8] sm:$0xff]
    %v171 = vld [vmem:[#allocation4 + $0x10] sm:$0xff]
    %v172 = vld [vmem:[#allocation4 + $0x18] sm:$0xff]
    %v173 = vld [vmem:[#allocation4 + $0x20] sm:$0xff]
    %v174 = vld [vmem:[#allocation4 + $0x28] sm:$0xff]
    %v175 = vld [vmem:[#allocation4 + $0x30] sm:$0xff]
    %v176 = vld [vmem:[#allocation4 + $0x38] sm:$0xff]
    %v178 = vperm.slane %v168, 0
    %180 = vmatpush.msra.mxu0 %v151
    %181 = vmatpush.msra.mxu0 %v150
    %182 = vmatpush.msra.mxu0 %v149
    %183 = vmatpush.msra.mxu0 %v148
    %184 = vmatpush.msra.mxu0 %v147
    %185 = vmatpush.msra.mxu0 %v146
    %186 = vmatpush.msra.mxu0 %v145
    %187 = vmatpush.msra.mxu0 %v144
    %188 = vmatpush.msra.mxu0 %v143
    %189 = vmatpush.msra.mxu0 %v142
    %190 = vmatpush.msra.mxu0 %v141
    %191 = vmatpush.msra.mxu0 %v140
    %192 = vmatpush.msra.mxu0 %v139
    %193 = vmatpush.msra.mxu0 %v138
    %194 = vmatpush.msra.mxu0 %v137
    %195 = vmatpush.msra.mxu0 %v136
    %196 = vmatmul.f32.gmra.mxu0 %v169
    %v197 = vpop.f32.mrf.mxu0
    %v198 = vadd.f32 %v178, %v197
    %199 = vmatmul.f32.gmra.mxu0 %v170
    %v200 = vpop.f32.mrf.mxu0
    %v201 = vadd.f32 %v178, %v200
    %202 = vmatmul.f32.gmra.mxu0 %v171
    %v203 = vpop.f32.mrf.mxu0
    %v204 = vadd.f32 %v178, %v203
    %205 = vmatmul.f32.gmra.mxu0 %v172
    %v206 = vpop.f32.mrf.mxu0
    %v207 = vadd.f32 %v178, %v206
    %208 = vmatmul.f32.gmra.mxu0 %v173
    %v209 = vpop.f32.mrf.mxu0
    %v210 = vadd.f32 %v178, %v209
    %211 = vmatmul.f32.gmra.mxu0 %v174
    %v212 = vpop.f32.mrf.mxu0
    %v213 = vadd.f32 %v178, %v212
    %214 = vmatmul.f32.gmra.mxu0 %v175
    %v215 = vpop.f32.mrf.mxu0
    %v216 = vadd.f32 %v178, %v215
    %217 = vmatmul.f32.gmra.mxu0 %v176
    %v218 = vpop.f32.mrf.mxu0
    %v219 = vadd.f32 %v178, %v218
    %220 = vdwg.mxu0
    %221 = vst [vmem:[#allocation3] sm:$0xff] %v198
    %222 = vst [vmem:[#allocation3 + $0x8] sm:$0xff] %v201
    %223 = vst [vmem:[#allocation3 + $0x10] sm:$0xff] %v204
    %224 = vst [vmem:[#allocation3 + $0x18] sm:$0xff] %v207
    %225 = vst [vmem:[#allocation3 + $0x20] sm:$0xff] %v210
    %226 = vst [vmem:[#allocation3 + $0x28] sm:$0xff] %v213
    %227 = vst [vmem:[#allocation3 + $0x30] sm:$0xff] %v216
    %228 = vst [vmem:[#allocation3 + $0x38] sm:$0xff] %v219
    %v229 = vld [vmem:[#allocation2] sm:$0xff]
    %v230 = vld [vmem:[#allocation3] sm:$0xff]
    %231 = vmatpush.msra.mxu0 %v167
    %232 = vmatpush.msra.mxu0 %v166
    %233 = vmatpush.msra.mxu0 %v165
    %234 = vmatpush.msra.mxu0 %v164
    %235 = vmatpush.msra.mxu0 %v163
    %236 = vmatpush.msra.mxu0 %v162
    %237 = vmatpush.msra.mxu0 %v161
    %238 = vmatpush.msra.mxu0 %v160
    %239 = vmatpush.msra.mxu0 %v159
    %240 = vmatpush.msra.mxu0 %v158
    %241 = vmatpush.msra.mxu0 %v157
    %242 = vmatpush.msra.mxu0 %v156
    %243 = vmatpush.msra.mxu0 %v155
    %244 = vmatpush.msra.mxu0 %v154
    %245 = vmatpush.msra.mxu0 %v153
    %246 = vmatpush.msra.mxu0 %v152
    %247 = vmatmul.f32.gmra.mxu0 %v229
    %v248 = vpop.f32.mrf.mxu0
    %v249 = vadd.f32 0.0, %v248
    %250 = vdwg.mxu0
    %v251 = vadd.f32 %v230, %v249
    %v252 = vtanh.pop %v251
    %253 = vst [vmem:[#allocation3] sm:$0xff] %v252
    %s254 = scalar_lea.vmem [#allocation3], 8
    %v255 = vld [vmem:[%s254] sm:$0xff]
    %256 = vmatpush.msra.mxu0 %v167
    %257 = vmatpush.msra.mxu0 %v166
    %258 = vmatpush.msra.mxu0 %v165
    %259 = vmatpush.msra.mxu0 %v164
    %260 = vmatpush.msra.mxu0 %v163
    %261 = vmatpush.msra.mxu0 %v162
    %262 = vmatpush.msra.mxu0 %v161
    %263 = vmatpush.msra.mxu0 %v160
    %264 = vmatpush.msra.mxu0 %v159
    %265 = vmatpush.msra.mxu0 %v158
    %266 = vmatpush.msra.mxu0 %v157
    %267 = vmatpush.msra.mxu0 %v156
    %268 = vmatpush.msra.mxu0 %v155
    %269 = vmatpush.msra.mxu0 %v154
    %270 = vmatpush.msra.mxu0 %v153
    %271 = vmatpush.msra.mxu0 %v152
    %272 = vmatmul.f32.gmra.mxu0 %v252
    %v273 = vpop.f32.mrf.mxu0
    %v274 = vadd.f32 0.0, %v273
    %275 = vdwg.mxu0
    %v276 = vadd.f32 %v255, %v274
    %v277 = vtanh.pop %v276
    %278 = vst [vmem:[%s254] sm:$0xff] %v277
    %s279 = scalar_lea.vmem [#allocation3], 16
    %v280 = vld [vmem:[%s279] sm:$0xff]
    %281 = vmatpush.msra.mxu0 %v167
    %282 = vmatpush.msra.mxu0 %v166
    %283 = vmatpush.msra.mxu0 %v165
    %284 = vmatpush.msra.mxu0 %v164
    %285 = vmatpush.msra.mxu0 %v163
    %286 = vmatpush.msra.mxu0 %v162
    %287 = vmatpush.msra.mxu0 %v161
    %288 = vmatpush.msra.mxu0 %v160
    %289 = vmatpush.msra.mxu0 %v159
    %290 = vmatpush.msra.mxu0 %v158
    %291 = vmatpush.msra.mxu0 %v157
    %292 = vmatpush.msra.mxu0 %v156
    %293 = vmatpush.msra.mxu0 %v155
    %294 = vmatpush.msra.mxu0 %v154
    %295 = vmatpush.msra.mxu0 %v153
    %296 = vmatpush.msra.mxu0 %v152
    %297 = vmatmul.f32.gmra.mxu0 %v277
    %v298 = vpop.f32.mrf.mxu0
    %v299 = vadd.f32 0.0, %v298
    %300 = vdwg.mxu0
    %v301 = vadd.f32 %v280, %v299
    %v302 = vtanh.pop %v301
    %303 = vst [vmem:[%s279] sm:$0xff] %v302
    %s304 = scalar_lea.vmem [#allocation3], 24
    %v305 = vld [vmem:[%s304] sm:$0xff]
    %306 = vmatpush.msra.mxu0 %v167
    %307 = vmatpush.msra.mxu0 %v166
    %308 = vmatpush.msra.mxu0 %v165
    %309 = vmatpush.msra.mxu0 %v164
    %310 = vmatpush.msra.mxu0 %v163
    %311 = vmatpush.msra.mxu0 %v162
    %312 = vmatpush.msra.mxu0 %v161
    %313 = vmatpush.msra.mxu0 %v160
    %314 = vmatpush.msra.mxu0 %v159
    %315 = vmatpush.msra.mxu0 %v158
    %316 = vmatpush.msra.mxu0 %v157
    %317 = vmatpush.msra.mxu0 %v156
    %318 = vmatpush.msra.mxu0 %v155
    %319 = vmatpush.msra.mxu0 %v154
    %320 = vmatpush.msra.mxu0 %v153
    %321 = vmatpush.msra.mxu0 %v152
    %322 = vmatmul.f32.gmra.mxu0 %v302
    %v323 = vpop.f32.mrf.mxu0
    %v324 = vadd.f32 0.0, %v323
    %325 = vdwg.mxu0
    %v326 = vadd.f32 %v305, %v324
    %v327 = vtanh.pop %v326
    %328 = vst [vmem:[%s304] sm:$0xff] %v327
    %s329 = scalar_lea.vmem [#allocation3], 32
    %v330 = vld [vmem:[%s329] sm:$0xff]
    %331 = vmatpush.msra.mxu0 %v167
    %332 = vmatpush.msra.mxu0 %v166
    %333 = vmatpush.msra.mxu0 %v165
    %334 = vmatpush.msra.mxu0 %v164
    %335 = vmatpush.msra.mxu0 %v163
    %336 = vmatpush.msra.mxu0 %v162
    %337 = vmatpush.msra.mxu0 %v161
    %338 = vmatpush.msra.mxu0 %v160
    %339 = vmatpush.msra.mxu0 %v159
    %340 = vmatpush.msra.mxu0 %v158
    %341 = vmatpush.msra.mxu0 %v157
    %342 = vmatpush.msra.mxu0 %v156
    %343 = vmatpush.msra.mxu0 %v155
    %344 = vmatpush.msra.mxu0 %v154
    %345 = vmatpush.msra.mxu0 %v153
    %346 = vmatpush.msra.mxu0 %v152
    %347 = vmatmul.f32.gmra.mxu0 %v327
    %v348 = vpop.f32.mrf.mxu0
    %v349 = vadd.f32 0.0, %v348
    %350 = vdwg.mxu0
    %v351 = vadd.f32 %v330, %v349
    %v352 = vtanh.pop %v351
    %353 = vst [vmem:[%s329] sm:$0xff] %v352
    %s354 = scalar_lea.vmem [#allocation3], 40
    %v355 = vld [vmem:[%s354] sm:$0xff]
    %356 = vmatpush.msra.mxu0 %v167
    %357 = vmatpush.msra.mxu0 %v166
    %358 = vmatpush.msra.mxu0 %v165
    %359 = vmatpush.msra.mxu0 %v164
    %360 = vmatpush.msra.mxu0 %v163
    %361 = vmatpush.msra.mxu0 %v162
    %362 = vmatpush.msra.mxu0 %v161
    %363 = vmatpush.msra.mxu0 %v160
    %364 = vmatpush.msra.mxu0 %v159
    %365 = vmatpush.msra.mxu0 %v158
    %366 = vmatpush.msra.mxu0 %v157
    %367 = vmatpush.msra.mxu0 %v156
    %368 = vmatpush.msra.mxu0 %v155
    %369 = vmatpush.msra.mxu0 %v154
    %370 = vmatpush.msra.mxu0 %v153
    %371 = vmatpush.msra.mxu0 %v152
    %372 = vmatmul.f32.gmra.mxu0 %v352
    %v373 = vpop.f32.mrf.mxu0
    %v374 = vadd.f32 0.0, %v373
    %375 = vdwg.mxu0
    %v376 = vadd.f32 %v355, %v374
    %v377 = vtanh.pop %v376
    %378 = vst [vmem:[%s354] sm:$0xff] %v377
    %s379 = scalar_lea.vmem [#allocation3], 48
    %v380 = vld [vmem:[%s379] sm:$0xff]
    %381 = vmatpush.msra.mxu0 %v167
    %382 = vmatpush.msra.mxu0 %v166
    %383 = vmatpush.msra.mxu0 %v165
    %384 = vmatpush.msra.mxu0 %v164
    %385 = vmatpush.msra.mxu0 %v163
    %386 = vmatpush.msra.mxu0 %v162
    %387 = vmatpush.msra.mxu0 %v161
    %388 = vmatpush.msra.mxu0 %v160
    %389 = vmatpush.msra.mxu0 %v159
    %390 = vmatpush.msra.mxu0 %v158
    %391 = vmatpush.msra.mxu0 %v157
    %392 = vmatpush.msra.mxu0 %v156
    %393 = vmatpush.msra.mxu0 %v155
    %394 = vmatpush.msra.mxu0 %v154
    %395 = vmatpush.msra.mxu0 %v153
    %396 = vmatpush.msra.mxu0 %v152
    %397 = vmatmul.f32.gmra.mxu0 %v377
    %v398 = vpop.f32.mrf.mxu0
    %v399 = vadd.f32 0.0, %v398
    %400 = vdwg.mxu0
    %v401 = vadd.f32 %v380, %v399
    %v402 = vtanh.pop %v401
    %403 = vst [vmem:[%s379] sm:$0xff] %v402
    %s404 = scalar_lea.vmem [#allocation3], 56
    %v405 = vld [vmem:[%s404] sm:$0xff]
    %406 = vmatpush.msra.mxu0 %v167
    %407 = vmatpush.msra.mxu0 %v166
    %408 = vmatpush.msra.mxu0 %v165
    %409 = vmatpush.msra.mxu0 %v164
    %410 = vmatpush.msra.mxu0 %v163
    %411 = vmatpush.msra.mxu0 %v162
    %412 = vmatpush.msra.mxu0 %v161
    %413 = vmatpush.msra.mxu0 %v160
    %414 = vmatpush.msra.mxu0 %v159
    %415 = vmatpush.msra.mxu0 %v158
    %416 = vmatpush.msra.mxu0 %v157
    %417 = vmatpush.msra.mxu0 %v156
    %418 = vmatpush.msra.mxu0 %v155
    %419 = vmatpush.msra.mxu0 %v154
    %420 = vmatpush.msra.mxu0 %v153
    %421 = vmatpush.msra.mxu0 %v152
    %422 = vmatmul.f32.gmra.mxu0 %v402
    %v423 = vpop.f32.mrf.mxu0
    %v424 = vadd.f32 0.0, %v423
    %425 = vdwg.mxu0
    %v426 = vadd.f32 %v405, %v424
    %v427 = vtanh.pop %v426
    %428 = vst [vmem:[%s404] sm:$0xff] %v427
    %429 = vst [vmem:[#allocation2] sm:$0xff] %v427
    %v430 = vld [vmem:[#allocation10] sm:$0xff]
    %v431 = vld [vmem:[#allocation10 + $0x8] sm:$0xff]
    %v432 = vld [vmem:[#allocation10 + $0x10] sm:$0xff]
    %v433 = vld [vmem:[#allocation10 + $0x18] sm:$0xff]
    %v434 = vld [vmem:[#allocation10 + $0x20] sm:$0xff]
    %v435 = vld [vmem:[#allocation10 + $0x28] sm:$0xff]
    %v436 = vld [vmem:[#allocation10 + $0x30] sm:$0xff]
    %v437 = vld [vmem:[#allocation10 + $0x38] sm:$0xff]
    %v438 = vld [vmem:[#allocation10 + $0x40] sm:$0xff]
    %v439 = vld [vmem:[#allocation10 + $0x48] sm:$0xff]
    %v440 = vld [vmem:[#allocation10 + $0x50] sm:$0xff]
    %v441 = vld [vmem:[#allocation10 + $0x58] sm:$0xff]
    %v442 = vld [vmem:[#allocation10 + $0x60] sm:$0xff]
    %v443 = vld [vmem:[#allocation10 + $0x68] sm:$0xff]
    %v444 = vld [vmem:[#allocation10 + $0x70] sm:$0xff]
    %v445 = vld [vmem:[#allocation10 + $0x78] sm:$0xff]
    %v446 = vld [vmem:[#allocation12] sm:$0xff]
    %v447 = vld [vmem:[#allocation12 + $0x8] sm:$0xff]
    %v448 = vld [vmem:[#allocation12 + $0x10] sm:$0xff]
    %v449 = vld [vmem:[#allocation12 + $0x18] sm:$0xff]
    %v450 = vld [vmem:[#allocation12 + $0x20] sm:$0xff]
    %v451 = vld [vmem:[#allocation12 + $0x28] sm:$0xff]
    %v452 = vld [vmem:[#allocation12 + $0x30] sm:$0xff]
    %v453 = vld [vmem:[#allocation12 + $0x38] sm:$0xff]
    %v454 = vld [vmem:[#allocation12 + $0x40] sm:$0xff]
    %v455 = vld [vmem:[#allocation12 + $0x48] sm:$0xff]
    %v456 = vld [vmem:[#allocation12 + $0x50] sm:$0xff]
    %v457 = vld [vmem:[#allocation12 + $0x58] sm:$0xff]
    %v458 = vld [vmem:[#allocation12 + $0x60] sm:$0xff]
    %v459 = vld [vmem:[#allocation12 + $0x68] sm:$0xff]
    %v460 = vld [vmem:[#allocation12 + $0x70] sm:$0xff]
    %v461 = vld [vmem:[#allocation12 + $0x78] sm:$0xff]
    %v462 = vld [vmem:[%s6] sm:$0x1]
    %v463 = vld [vmem:[#allocation3] sm:$0xff]
    %v464 = vld [vmem:[#allocation3 + $0x8] sm:$0xff]
    %v465 = vld [vmem:[#allocation3 + $0x10] sm:$0xff]
    %v466 = vld [vmem:[#allocation3 + $0x18] sm:$0xff]
    %v467 = vld [vmem:[#allocation3 + $0x20] sm:$0xff]
    %v468 = vld [vmem:[#allocation3 + $0x28] sm:$0xff]
    %v469 = vld [vmem:[#allocation3 + $0x30] sm:$0xff]
    %v470 = vld [vmem:[#allocation3 + $0x38] sm:$0xff]
    %v472 = vperm.slane %v462, 0
    %474 = vmatpush.msra.mxu0 %v445
    %475 = vmatpush.msra.mxu0 %v444
    %476 = vmatpush.msra.mxu0 %v443
    %477 = vmatpush.msra.mxu0 %v442
    %478 = vmatpush.msra.mxu0 %v441
    %479 = vmatpush.msra.mxu0 %v440
    %480 = vmatpush.msra.mxu0 %v439
    %481 = vmatpush.msra.mxu0 %v438
    %482 = vmatpush.msra.mxu0 %v437
    %483 = vmatpush.msra.mxu0 %v436
    %484 = vmatpush.msra.mxu0 %v435
    %485 = vmatpush.msra.mxu0 %v434
    %486 = vmatpush.msra.mxu0 %v433
    %487 = vmatpush.msra.mxu0 %v432
    %488 = vmatpush.msra.mxu0 %v431
    %489 = vmatpush.msra.mxu0 %v430
    %490 = vmatmul.f32.gmra.mxu0 %v463
    %v491 = vpop.f32.mrf.mxu0
    %v492 = vadd.f32 %v472, %v491
    %493 = vmatmul.f32.gmra.mxu0 %v464
    %v494 = vpop.f32.mrf.mxu0
    %v495 = vadd.f32 %v472, %v494
    %496 = vmatmul.f32.gmra.mxu0 %v465
    %v497 = vpop.f32.mrf.mxu0
    %v498 = vadd.f32 %v472, %v497
    %499 = vmatmul.f32.gmra.mxu0 %v466
    %v500 = vpop.f32.mrf.mxu0
    %v501 = vadd.f32 %v472, %v500
    %502 = vmatmul.f32.gmra.mxu0 %v467
    %v503 = vpop.f32.mrf.mxu0
    %v504 = vadd.f32 %v472, %v503
    %505 = vmatmul.f32.gmra.mxu0 %v468
    %v506 = vpop.f32.mrf.mxu0
    %v507 = vadd.f32 %v472, %v506
    %508 = vmatmul.f32.gmra.mxu0 %v469
    %v509 = vpop.f32.mrf.mxu0
    %v510 = vadd.f32 %v472, %v509
    %511 = vmatmul.f32.gmra.mxu0 %v470
    %v512 = vpop.f32.mrf.mxu0
    %v513 = vadd.f32 %v472, %v512
    %514 = vdwg.mxu0
    %515 = vst [vmem:[#allocation3] sm:$0xff] %v492
    %516 = vst [vmem:[#allocation3 + $0x8] sm:$0xff] %v495
    %517 = vst [vmem:[#allocation3 + $0x10] sm:$0xff] %v498
    %518 = vst [vmem:[#allocation3 + $0x18] sm:$0xff] %v501
    %519 = vst [vmem:[#allocation3 + $0x20] sm:$0xff] %v504
    %520 = vst [vmem:[#allocation3 + $0x28] sm:$0xff] %v507
    %521 = vst [vmem:[#allocation3 + $0x30] sm:$0xff] %v510
    %522 = vst [vmem:[#allocation3 + $0x38] sm:$0xff] %v513
    %s523 = scalar_lea.vmem [#allocation2], 8
    %v524 = vld [vmem:[%s523] sm:$0xff]
    %v525 = vld [vmem:[#allocation3] sm:$0xff]
    %526 = vmatpush.msra.mxu0 %v461
    %527 = vmatpush.msra.mxu0 %v460
    %528 = vmatpush.msra.mxu0 %v459
    %529 = vmatpush.msra.mxu0 %v458
    %530 = vmatpush.msra.mxu0 %v457
    %531 = vmatpush.msra.mxu0 %v456
    %532 = vmatpush.msra.mxu0 %v455
    %533 = vmatpush.msra.mxu0 %v454
    %534 = vmatpush.msra.mxu0 %v453
    %535 = vmatpush.msra.mxu0 %v452
    %536 = vmatpush.msra.mxu0 %v451
    %537 = vmatpush.msra.mxu0 %v450
    %538 = vmatpush.msra.mxu0 %v449
    %539 = vmatpush.msra.mxu0 %v448
    %540 = vmatpush.msra.mxu0 %v447
    %541 = vmatpush.msra.mxu0 %v446
    %542 = vmatmul.f32.gmra.mxu0 %v524
    %v543 = vpop.f32.mrf.mxu0
    %v544 = vadd.f32 0.0, %v543
    %545 = vdwg.mxu0
    %v546 = vadd.f32 %v525, %v544
    %v547 = vtanh.pop %v546
    %548 = vst [vmem:[#allocation3] sm:$0xff] %v547
    %v549 = vld [vmem:[%s254] sm:$0xff]
    %550 = vmatpush.msra.mxu0 %v461
    %551 = vmatpush.msra.mxu0 %v460
    %552 = vmatpush.msra.mxu0 %v459
    %553 = vmatpush.msra.mxu0 %v458
    %554 = vmatpush.msra.mxu0 %v457
    %555 = vmatpush.msra.mxu0 %v456
    %556 = vmatpush.msra.mxu0 %v455
    %557 = vmatpush.msra.mxu0 %v454
    %558 = vmatpush.msra.mxu0 %v453
    %559 = vmatpush.msra.mxu0 %v452
    %560 = vmatpush.msra.mxu0 %v451
    %561 = vmatpush.msra.mxu0 %v450
    %562 = vmatpush.msra.mxu0 %v449
    %563 = vmatpush.msra.mxu0 %v448
    %564 = vmatpush.msra.mxu0 %v447
    %565 = vmatpush.msra.mxu0 %v446
    %566 = vmatmul.f32.gmra.mxu0 %v547
    %v567 = vpop.f32.mrf.mxu0
    %v568 = vadd.f32 0.0, %v567
    %569 = vdwg.mxu0
    %v570 = vadd.f32 %v549, %v568
    %v571 = vtanh.pop %v570
    %572 = vst [vmem:[%s254] sm:$0xff] %v571
    %v573 = vld [vmem:[%s279] sm:$0xff]
    %574 = vmatpush.msra.mxu0 %v461
    %575 = vmatpush.msra.mxu0 %v460
    %576 = vmatpush.msra.mxu0 %v459
    %577 = vmatpush.msra.mxu0 %v458
    %578 = vmatpush.msra.mxu0 %v457
    %579 = vmatpush.msra.mxu0 %v456
    %580 = vmatpush.msra.mxu0 %v455
    %581 = vmatpush.msra.mxu0 %v454
    %582 = vmatpush.msra.mxu0 %v453
    %583 = vmatpush.msra.mxu0 %v452
    %584 = vmatpush.msra.mxu0 %v451
    %585 = vmatpush.msra.mxu0 %v450
    %586 = vmatpush.msra.mxu0 %v449
    %587 = vmatpush.msra.mxu0 %v448
    %588 = vmatpush.msra.mxu0 %v447
    %589 = vmatpush.msra.mxu0 %v446
    %590 = vmatmul.f32.gmra.mxu0 %v571
    %v591 = vpop.f32.mrf.mxu0
    %v592 = vadd.f32 0.0, %v591
    %593 = vdwg.mxu0
    %v594 = vadd.f32 %v573, %v592
    %v595 = vtanh.pop %v594
    %596 = vst [vmem:[%s279] sm:$0xff] %v595
    %v597 = vld [vmem:[%s304] sm:$0xff]
    %598 = vmatpush.msra.mxu0 %v461
    %599 = vmatpush.msra.mxu0 %v460
    %600 = vmatpush.msra.mxu0 %v459
    %601 = vmatpush.msra.mxu0 %v458
    %602 = vmatpush.msra.mxu0 %v457
    %603 = vmatpush.msra.mxu0 %v456
    %604 = vmatpush.msra.mxu0 %v455
    %605 = vmatpush.msra.mxu0 %v454
    %606 = vmatpush.msra.mxu0 %v453
    %607 = vmatpush.msra.mxu0 %v452
    %608 = vmatpush.msra.mxu0 %v451
    %609 = vmatpush.msra.mxu0 %v450
    %610 = vmatpush.msra.mxu0 %v449
    %611 = vmatpush.msra.mxu0 %v448
    %612 = vmatpush.msra.mxu0 %v447
    %613 = vmatpush.msra.mxu0 %v446
    %614 = vmatmul.f32.gmra.mxu0 %v595
    %v615 = vpop.f32.mrf.mxu0
    %v616 = vadd.f32 0.0, %v615
    %617 = vdwg.mxu0
    %v618 = vadd.f32 %v597, %v616
    %v619 = vtanh.pop %v618
    %620 = vst [vmem:[%s304] sm:$0xff] %v619
    %v621 = vld [vmem:[%s329] sm:$0xff]
    %622 = vmatpush.msra.mxu0 %v461
    %623 = vmatpush.msra.mxu0 %v460
    %624 = vmatpush.msra.mxu0 %v459
    %625 = vmatpush.msra.mxu0 %v458
    %626 = vmatpush.msra.mxu0 %v457
    %627 = vmatpush.msra.mxu0 %v456
    %628 = vmatpush.msra.mxu0 %v455
    %629 = vmatpush.msra.mxu0 %v454
    %630 = vmatpush.msra.mxu0 %v453
    %631 = vmatpush.msra.mxu0 %v452
    %632 = vmatpush.msra.mxu0 %v451
    %633 = vmatpush.msra.mxu0 %v450
    %634 = vmatpush.msra.mxu0 %v449
    %635 = vmatpush.msra.mxu0 %v448
    %636 = vmatpush.msra.mxu0 %v447
    %637 = vmatpush.msra.mxu0 %v446
    %638 = vmatmul.f32.gmra.mxu0 %v619
    %v639 = vpop.f32.mrf.mxu0
    %v640 = vadd.f32 0.0, %v639
    %641 = vdwg.mxu0
    %v642 = vadd.f32 %v621, %v640
    %v643 = vtanh.pop %v642
    %644 = vst [vmem:[%s329] sm:$0xff] %v643
    %v645 = vld [vmem:[%s354] sm:$0xff]
    %646 = vmatpush.msra.mxu0 %v461
    %647 = vmatpush.msra.mxu0 %v460
    %648 = vmatpush.msra.mxu0 %v459
    %649 = vmatpush.msra.mxu0 %v458
    %650 = vmatpush.msra.mxu0 %v457
    %651 = vmatpush.msra.mxu0 %v456
    %652 = vmatpush.msra.mxu0 %v455
    %653 = vmatpush.msra.mxu0 %v454
    %654 = vmatpush.msra.mxu0 %v453
    %655 = vmatpush.msra.mxu0 %v452
    %656 = vmatpush.msra.mxu0 %v451
    %657 = vmatpush.msra.mxu0 %v450
    %658 = vmatpush.msra.mxu0 %v449
    %659 = vmatpush.msra.mxu0 %v448
    %660 = vmatpush.msra.mxu0 %v447
    %661 = vmatpush.msra.mxu0 %v446
    %662 = vmatmul.f32.gmra.mxu0 %v643
    %v663 = vpop.f32.mrf.mxu0
    %v664 = vadd.f32 0.0, %v663
    %665 = vdwg.mxu0
    %v666 = vadd.f32 %v645, %v664
    %v667 = vtanh.pop %v666
    %668 = vst [vmem:[%s354] sm:$0xff] %v667
    %v669 = vld [vmem:[%s379] sm:$0xff]
    %670 = vmatpush.msra.mxu0 %v461
    %671 = vmatpush.msra.mxu0 %v460
    %672 = vmatpush.msra.mxu0 %v459
    %673 = vmatpush.msra.mxu0 %v458
    %674 = vmatpush.msra.mxu0 %v457
    %675 = vmatpush.msra.mxu0 %v456
    %676 = vmatpush.msra.mxu0 %v455
    %677 = vmatpush.msra.mxu0 %v454
    %678 = vmatpush.msra.mxu0 %v453
    %679 = vmatpush.msra.mxu0 %v452
    %680 = vmatpush.msra.mxu0 %v451
    %681 = vmatpush.msra.mxu0 %v450
    %682 = vmatpush.msra.mxu0 %v449
    %683 = vmatpush.msra.mxu0 %v448
    %684 = vmatpush.msra.mxu0 %v447
    %685 = vmatpush.msra.mxu0 %v446
    %686 = vmatmul.f32.gmra.mxu0 %v667
    %v687 = vpop.f32.mrf.mxu0
    %v688 = vadd.f32 0.0, %v687
    %689 = vdwg.mxu0
    %v690 = vadd.f32 %v669, %v688
    %v691 = vtanh.pop %v690
    %692 = vst [vmem:[%s379] sm:$0xff] %v691
    %v693 = vld [vmem:[%s404] sm:$0xff]
    %694 = vmatpush.msra.mxu0 %v461
    %695 = vmatpush.msra.mxu0 %v460
    %696 = vmatpush.msra.mxu0 %v459
    %697 = vmatpush.msra.mxu0 %v458
    %698 = vmatpush.msra.mxu0 %v457
    %699 = vmatpush.msra.mxu0 %v456
    %700 = vmatpush.msra.mxu0 %v455
    %701 = vmatpush.msra.mxu0 %v454
    %702 = vmatpush.msra.mxu0 %v453
    %703 = vmatpush.msra.mxu0 %v452
    %704 = vmatpush.msra.mxu0 %v451
    %705 = vmatpush.msra.mxu0 %v450
    %706 = vmatpush.msra.mxu0 %v449
    %707 = vmatpush.msra.mxu0 %v448
    %708 = vmatpush.msra.mxu0 %v447
    %709 = vmatpush.msra.mxu0 %v446
    %710 = vmatmul.f32.gmra.mxu0 %v691
    %v711 = vpop.f32.mrf.mxu0
    %v712 = vadd.f32 0.0, %v711
    %713 = vdwg.mxu0
    %v714 = vadd.f32 %v693, %v712
    %v715 = vtanh.pop %v714
    %716 = vst [vmem:[%s404] sm:$0xff] %v715
    %717 = vst [vmem:[%s523] sm:$0xff] %v715
    %v718 = vld [vmem:[#allocation3] sm:$0xff]
    %v719 = vld [vmem:[#allocation3 + $0x8] sm:$0xff]
    %v720 = vld [vmem:[#allocation3 + $0x10] sm:$0xff]
    %v721 = vld [vmem:[#allocation3 + $0x18] sm:$0xff]
    %v722 = vld [vmem:[#allocation3 + $0x20] sm:$0xff]
    %v723 = vld [vmem:[#allocation3 + $0x28] sm:$0xff]
    %v724 = vld [vmem:[#allocation3 + $0x30] sm:$0xff]
    %v725 = vld [vmem:[#allocation3 + $0x38] sm:$0xff]
    %v726 = vld [vmem:[#allocation13] sm:$0xff]
    %v727 = vld [vmem:[#allocation13 + $0x8] sm:$0xff]
    %v728 = vld [vmem:[#allocation13 + $0x10] sm:$0xff]
    %v729 = vld [vmem:[#allocation13 + $0x18] sm:$0xff]
    %v730 = vld [vmem:[#allocation13 + $0x20] sm:$0xff]
    %v731 = vld [vmem:[#allocation13 + $0x28] sm:$0xff]
    %v732 = vld [vmem:[#allocation13 + $0x30] sm:$0xff]
    %v733 = vld [vmem:[#allocation13 + $0x38] sm:$0xff]
    %v734 = vld [vmem:[#allocation13 + $0x40] sm:$0xff]
    %v735 = vld [vmem:[#allocation13 + $0x48] sm:$0xff]
    %v736 = vld [vmem:[#allocation13 + $0x50] sm:$0xff]
    %v737 = vld [vmem:[#allocation13 + $0x58] sm:$0xff]
    %v738 = vld [vmem:[#allocation13 + $0x60] sm:$0xff]
    %v739 = vld [vmem:[#allocation13 + $0x68] sm:$0xff]
    %v740 = vld [vmem:[#allocation13 + $0x70] sm:$0xff]
    %v741 = vld [vmem:[#allocation13 + $0x78] sm:$0xff]
    %v742 = vld [vmem:[%s8] sm:$0x1]
    %v744 = vperm.slane %v742, 0
    %746 = vmatpush.msra.mxu0 %v741
    %747 = vmatpush.msra.mxu0 %v740
    %748 = vmatpush.msra.mxu0 %v739
    %749 = vmatpush.msra.mxu0 %v738
    %750 = vmatpush.msra.mxu0 %v737
    %751 = vmatpush.msra.mxu0 %v736
    %752 = vmatpush.msra.mxu0 %v735
    %753 = vmatpush.msra.mxu0 %v734
    %754 = vmatpush.msra.mxu0 %v733
    %755 = vmatpush.msra.mxu0 %v732
    %756 = vmatpush.msra.mxu0 %v731
    %757 = vmatpush.msra.mxu0 %v730
    %758 = vmatpush.msra.mxu0 %v729
    %759 = vmatpush.msra.mxu0 %v728
    %760 = vmatpush.msra.mxu0 %v727
    %761 = vmatpush.msra.mxu0 %v726
    %762 = vmatmul.f32.gmra.mxu0 %v718
    %v763 = vpop.f32.mrf.mxu0
    %v764 = vadd.f32 %v744, %v763
    %765 = vmatmul.f32.gmra.mxu0 %v719
    %v766 = vpop.f32.mrf.mxu0
    %v767 = vadd.f32 %v744, %v766
    %768 = vmatmul.f32.gmra.mxu0 %v720
    %v769 = vpop.f32.mrf.mxu0
    %v770 = vadd.f32 %v744, %v769
    %771 = vmatmul.f32.gmra.mxu0 %v721
    %v772 = vpop.f32.mrf.mxu0
    %v773 = vadd.f32 %v744, %v772
    %774 = vmatmul.f32.gmra.mxu0 %v722
    %v775 = vpop.f32.mrf.mxu0
    %v776 = vadd.f32 %v744, %v775
    %777 = vmatmul.f32.gmra.mxu0 %v723
    %v778 = vpop.f32.mrf.mxu0
    %v779 = vadd.f32 %v744, %v778
    %780 = vmatmul.f32.gmra.mxu0 %v724
    %v781 = vpop.f32.mrf.mxu0
    %v782 = vadd.f32 %v744, %v781
    %783 = vmatmul.f32.gmra.mxu0 %v725
    %v784 = vpop.f32.mrf.mxu0
    %v785 = vadd.f32 %v744, %v784
    %786 = vdwg.mxu0
    %787 = vst [vmem:[#allocation15] sm:$0xff] %v764
    %788 = vst [vmem:[#allocation15 + $0x8] sm:$0xff] %v767
    %789 = vst [vmem:[#allocation15 + $0x10] sm:$0xff] %v770
    %790 = vst [vmem:[#allocation15 + $0x18] sm:$0xff] %v773
    %791 = vst [vmem:[#allocation15 + $0x20] sm:$0xff] %v776
    %792 = vst [vmem:[#allocation15 + $0x28] sm:$0xff] %v779
    %793 = vst [vmem:[#allocation15 + $0x30] sm:$0xff] %v782
    %794 = vst [vmem:[#allocation15 + $0x38] sm:$0xff] %v785
    // Predicated region
    $region66: #{tpu_custom_call.1} parent=1 // pred_check
      %p795 = pneg %p130
    $region67: #{tpu_custom_call.1} parent=1 // pred_check_branch
      %797 = sbr.rel (%p795) target = $region69
    $region68: #{tpu_custom_call.1} parent=1 // pred_region
      %v798 = vld [vmem:[#allocation2] sm:$0xff]
      %v799 = vld [vmem:[#allocation2 + $0x8] sm:$0xff]
      %800 = vst [vmem:[#allocation16] sm:$0xff] %v798
      %801 = vst [vmem:[#allocation16 + $0x8] sm:$0xff] %v799
    $region69: #{tpu_custom_call.1} parent=1 // pred_fallthru
      _
    // Predicated region
    $region70: #{tpu_custom_call.1} parent=1 // pred_check
      _
    $region71: #{tpu_custom_call.1} parent=1 // pred_check_branch
      %803 = sbr.rel (0) target = $region73
    $region72: #{tpu_custom_call.1} parent=1 // pred_region
      %805 = vsyncadd [#allocation6], 0
      %s806 = sshll.u32 [#allocation15], 4
      %s807 = int_to_ptr.vmem [resolvable:$true] %s806
      %s808 = sshll.u32 %s9, 4
      %s809 = int_to_ptr.hbm [resolvable:$true] %s808
      %814 = dma.vmem_to_hbm [thread:$0]  %s807, 1024, %s809, [#allocation6], 128, 128, 8
    $region73: #{tpu_custom_call.1} parent=1 // pred_fallthru
      _
    // Predicated region
    $region74: #{tpu_custom_call.1} parent=1 // pred_check
      _
    $region75: #{tpu_custom_call.1} parent=1 // pred_check_branch
      %816 = sbr.rel (0) target = $region77
    $region76: #{tpu_custom_call.1} parent=1 // pred_region
      %818 = vsyncadd [#allocation17], 0
      %s819 = sshll.u32 [#allocation16], 4
      %s820 = int_to_ptr.vmem [resolvable:$true] %s819
      %s821 = sshll.u32 %s10, 4
      %s822 = int_to_ptr.hbm [resolvable:$true] %s821
      %827 = dma.vmem_to_hbm [thread:$0]  %s820, 256, %s822, [#allocation17], 128, 128, 8
    $region77: #{tpu_custom_call.1} parent=1 // pred_fallthru
      _
    // Predicated region
    $region78: #{tpu_custom_call.1} parent=1 // pred_check
      _
    $region79: #{tpu_custom_call.1} parent=1 // pred_check_branch
      %829 = sbr.rel (0) target = $region81
    $region80: #{tpu_custom_call.1} parent=1 // pred_region
      %831 = dma.done [#allocation6], 1024
    $region81: #{tpu_custom_call.1} parent=1 // pred_fallthru
      _
    // Predicated region
    $region82: #{tpu_custom_call.1} parent=1 // pred_check
      _
    $region83: #{tpu_custom_call.1} parent=1 // pred_check_branch
      %833 = sbr.rel (0) target = $region85
    $region84: #{tpu_custom_call.1} parent=1 // pred_region
      %835 = dma.done [#allocation17], 256
    $region85: #{tpu_custom_call.1} parent=1 // pred_fallthru
      _
    %836 = vsyncpa [#allocation5], 1
    %837 = vsyncpa [#allocation8], 1
    %838 = vsyncpa [#allocation11], 1
    %839 = vsyncpa [#allocation14], 1
    %840 = vsyncpa [#allocation6], 1
    %841 = vsyncpa [#allocation17], 1

</llo_original>
